<compile_context>
chip_gen: v5e
topology: v5e:2x2
jax: 0.10.0
libtpu: 0.0.40
codegen_flags: <defaults>
</compile_context>

<pallas_src>
import jax
import jax.numpy as jnp
from jax.experimental import pallas as pl
from jax.experimental.pallas import tpu as pltpu

NUM_REGIONS = 36  # hard-coded in the PyTorch forward (expand(batch, 36, E))


def _matching_attention_kernel(vis_ref, emb_ref, uv_ref, ue_ref, c_ref, o_ref):
    # vis_ref : (tb, 36, V)  f32 or bf16      emb_ref : (tb, E)  f32 or bf16
    # uv_ref  : (1, V) f32                    ue_ref  : (1, E) f32
    # c_ref   : (1, 1) f32 scalar in SMEM     o_ref   : (tb, V) f32 (lane-dense)
    vis = vis_ref[...].astype(jnp.float32)    # upcast hides under DMA
    emb = emb_ref[...].astype(jnp.float32)
    uv = uv_ref[...]                          # (1, V)
    ue = ue_ref[...]                          # (1, E)
    c = c_ref[0, 0]                           # fused scalar bias

    # Fused linear1 -> linear2 score (no nonlinearity between the Linears, so
    # they collapse to a single dot with precomputed vectors):
    #   s[b, r] = vis[b, r, :] . u_v + emb[b, :] . u_e + c
    s_vis = jnp.sum(vis * uv, axis=-1)                     # (tb, 36) lane reduce
    s_emb = jnp.sum(emb * ue, axis=-1, keepdims=True)      # (tb, 1)
    s = jnp.maximum(s_vis + s_emb + c, 0.0)                # ReLU after +b2

    # Softmax over the 36 regions, strictly per batch row (keeps any garbage
    # rows of a partial last block from leaking into valid rows).
    m = jnp.max(s, axis=-1, keepdims=True)
    e = jnp.exp(s - m)
    w = e * pl.reciprocal(jnp.sum(e, axis=-1, keepdims=True), approx=True)

    # Weighted sum of visual features over the 36 regions -> (tb, V).
    o_ref[...] = jnp.sum(vis * w[:, :, None], axis=1)


def _pick_batch_tile(B, R, V, E, in_itemsize, vmem_budget_bytes):
    """Biggest batch tile that fits the VMEM budget, keeping >= ~8 grid steps."""
    granule = max(8, 32 // in_itemsize)           # sublane granule: f32->8, bf16->16
    r_pad = pl.cdiv(R, granule) * granule         # 36 -> 40 (f32) / 48 (bf16)
    # Double-buffered per-batch-row footprint: vis + emb input blocks in the
    # streaming dtype, plus the f32 output block.
    per_row = 2 * (r_pad * V + E) * in_itemsize + 2 * V * 4
    tb = vmem_budget_bytes // max(per_row, 1)
    tb = max(8, min(256, (tb // 8) * 8))
    # Keep >= ~8 grid steps when the batch allows it: feeds both v7x
    # TensorCores and leaves >=4 steps/core for prefetch/compute overlap.
    steps_cap = max(8, pl.cdiv(pl.cdiv(B, 8), 8) * 8)
    return min(tb, steps_cap)


def matching_attention(vis_input, embed_input, params, *, tb=None,
                       vmem_budget_bytes=24 << 20):
    """vis_input: (B, 36, V) f32/bf16; embed_input: (B, E) f32/bf16 -> (B, V) f32.

    `vmem_budget_bytes` sizes the double-buffered tile: 24 MiB default is safe
    on every generation (incl. v7x's 64 MiB VMEM); raise to ~64-96 MiB on
    v6e/v5e (128 MiB physical) for very large V.
    """
    B, R, V = vis_input.shape
    assert R == NUM_REGIONS
    E = embed_input.shape[1]
    w1, b1, w2, b2 = params["w1"], params["b1"], params["w2"], params["b2"]
    M = w1.shape[0]

    # ---- One-time algebraic fold of the two Linear layers (wrapper side) ----
    # PyTorch Linear stores W as (out, in).  W1^T is (V+E, M); w2 is (1, M).
    w1_t = jnp.transpose(w1).astype(jnp.float32)               # (V+E, M)
    u = w1_t @ w2.reshape(M, 1).astype(jnp.float32)            # (V+E, 1)
    u_v = u[:V, 0].reshape(1, V)                                # (1, V) lane-dense
    u_e = u[V:, 0].reshape(1, E)                                # (1, E) lane-dense
    c = (jnp.dot(b1.astype(jnp.float32), w2.reshape(M).astype(jnp.float32))
         + b2[0]).reshape(1, 1).astype(jnp.float32)             # scalar -> SMEM

    in_itemsize = jnp.dtype(vis_input.dtype).itemsize
    if tb is None:
        tb = _pick_batch_tile(B, R, V, E, in_itemsize, vmem_budget_bytes)

    # No zero-pad copy of vis: grid = cdiv and Pallas clamps the partial last
    # block (reads of the OOB tail are garbage but stay per-row; writes masked).
    grid = (pl.cdiv(B, tb),)
    vmem_limit = min(vmem_budget_bytes + (8 << 20), 100 << 20)

    out = pl.pallas_call(
        _matching_attention_kernel,
        out_shape=jax.ShapeDtypeStruct((B, V), jnp.float32),
        grid=grid,
        in_specs=[
            pl.BlockSpec((tb, R, V), lambda b: (b, 0, 0)),      # tb batch rows/step
            pl.BlockSpec((tb, E), lambda b: (b, 0)),            # matching embed rows
            pl.BlockSpec((1, V), lambda b: (0, 0)),             # fused vis vector
            pl.BlockSpec((1, E), lambda b: (0, 0)),             # fused embed vector
            pl.BlockSpec(memory_space=pltpu.MemorySpace.SMEM),  # fused scalar bias
        ],
        out_specs=pl.BlockSpec((tb, V), lambda b: (b, 0)),      # lane-dense store
        compiler_params=pltpu.CompilerParams(
            dimension_semantics=("parallel",),                   # megacore sharding
            vmem_limit_bytes=vmem_limit),
    )(vis_input, embed_input, u_v, u_e, c)

    return out


def make_params(key, visual_dim, embed_dim, matchattn_dim):
    """Deterministic synthetic parameters matching nn.Linear shapes."""
    k1, k2, k3, k4 = jax.random.split(key, 4)
    in1 = visual_dim + embed_dim
    return {
        "w1": jax.random.normal(k1, (matchattn_dim, in1), jnp.float32) * 0.05,
        "b1": jax.random.normal(k2, (matchattn_dim,), jnp.float32) * 0.05,
        "w2": jax.random.normal(k3, (1, matchattn_dim), jnp.float32) * 0.05,
        "b2": jax.random.normal(k4, (1,), jnp.float32) * 0.05,
    }


def _reference(vis_input, embed_input, params):
    """Pure-JAX reference mirroring the PyTorch forward (unfused)."""
    B, R, V = vis_input.shape
    E = embed_input.shape[1]
    emb = jnp.broadcast_to(embed_input[:, None, :], (B, R, E))
    x = jnp.concatenate([vis_input, emb], axis=2)               # (B, 36, V+E)
    h = x @ params["w1"].T + params["b1"]                        # (B, 36, M)
    s = h @ params["w2"].T + params["b2"]                        # (B, 36, 1)
    s = jnp.maximum(s, 0.0)
    w = jax.nn.softmax(s, axis=1)
    return jnp.sum(vis_input * w, axis=1)                        # (B, V)


if __name__ == "__main__":
    # Small, layout-friendly dims.  B=20 is deliberately NOT a multiple of the
    # batch tile so the partial-last-block (no-pad-copy) path is exercised.
    B, V, E, M = 20, 128, 64, 48

    key = jax.random.PRNGKey(0)
    k_vis, k_emb, k_par = jax.random.split(key, 3)
    vis_input = jax.random.normal(k_vis, (B, NUM_REGIONS, V), jnp.float32)
    embed_input = jax.random.normal(k_emb, (B, E), jnp.float32)
    params = make_params(k_par, V, E, M)

    # f32 streaming path.
    out = jax.block_until_ready(matching_attention(vis_input, embed_input, params))
    ref = _reference(vis_input, embed_input, params)
    assert out.shape == (B, V)
    # Tolerance covers the f32 rounding change from the linear fold and the
    # EUP approximate reciprocal in the softmax denominator.
    assert jnp.allclose(out, ref, atol=1e-3, rtol=1e-3), "f32 mismatch vs reference"

    # bf16 streaming path (halves HBM bytes of the dominant vis read; kernel
    # upcasts to f32 after load so all math stays f32).
    vis_bf16 = vis_input.astype(jnp.bfloat16)
    emb_bf16 = embed_input.astype(jnp.bfloat16)
    out_bf16 = jax.block_until_ready(matching_attention(vis_bf16, emb_bf16, params))
    ref_bf16 = _reference(vis_bf16.astype(jnp.float32),
                          emb_bf16.astype(jnp.float32), params)
    assert jnp.allclose(out_bf16, ref_bf16, atol=1e-2, rtol=1e-2), \
        "bf16 mismatch vs reference"

    print("KERNEL_OK")
</pallas_src>

<mosaic_0001>
module attributes {stable_mosaic.version = 11 : i64} {
  func.func @_matching_attention_kernel(%arg0: i32, %arg1: memref<8x36x128xf32, #tpu.memory_space<vmem>>, %arg2: memref<8x64xf32, #tpu.memory_space<vmem>>, %arg3: memref<1x128xf32, #tpu.memory_space<vmem>>, %arg4: memref<1x64xf32, #tpu.memory_space<vmem>>, %arg5: memref<1x1xf32, #tpu.memory_space<smem>>, %arg6: memref<8x128xf32, #tpu.memory_space<vmem>>) attributes {dimension_semantics = [#tpu.dimension_semantics<parallel>], iteration_bounds = array<i64: 3>, scalar_prefetch = 0 : i64, scratch_operands = 0 : i64, tpu.core_type = #tpu.core_type<tc>, window_params = [{transform_indices = @transform_0, window_bounds = array<i64: 8, 36, 128>}, {transform_indices = @transform_1, window_bounds = array<i64: 8, 64>}, {pipeline_mode = #tpu.pipeline_mode<synchronous>, transform_indices = @transform_2, window_bounds = array<i64: 1, 128>}, {pipeline_mode = #tpu.pipeline_mode<synchronous>, transform_indices = @transform_3, window_bounds = array<i64: 1, 64>}, {transform_indices = @transform_4, window_bounds = array<i64: 1, 1>}, {transform_indices = @transform_5, window_bounds = array<i64: 8, 128>}]} {
    %c0 = arith.constant 0 : index
    %c0_0 = arith.constant 0 : index
    %c0_1 = arith.constant 0 : index
    %0 = vector.load %arg1[%c0, %c0_0, %c0_1] : memref<8x36x128xf32, #tpu.memory_space<vmem>>, vector<8x36x128xf32>
    %c0_2 = arith.constant 0 : index
    %c0_3 = arith.constant 0 : index
    %1 = vector.load %arg2[%c0_2, %c0_3] : memref<8x64xf32, #tpu.memory_space<vmem>>, vector<8x64xf32>
    %c0_4 = arith.constant 0 : index
    %c0_5 = arith.constant 0 : index
    %2 = vector.load %arg3[%c0_4, %c0_5] : memref<1x128xf32, #tpu.memory_space<vmem>>, vector<1x128xf32>
    %c0_6 = arith.constant 0 : index
    %c0_7 = arith.constant 0 : index
    %3 = vector.load %arg4[%c0_6, %c0_7] : memref<1x64xf32, #tpu.memory_space<vmem>>, vector<1x64xf32>
    %c0_8 = arith.constant 0 : index
    %c0_9 = arith.constant 0 : index
    %4 = memref.load %arg5[%c0_8, %c0_9] : memref<1x1xf32, #tpu.memory_space<smem>>
    %5 = vector.shape_cast %2 : vector<1x128xf32> to vector<1x1x128xf32>
    %6 = vector.broadcast %5 : vector<1x1x128xf32> to vector<8x36x128xf32>
    %7 = arith.mulf %0, %6 : vector<8x36x128xf32>
    %cst = arith.constant dense<0.000000e+00> : vector<8x36xf32>
    %8 = vector.multi_reduction <add>, %7, %cst [2] : vector<8x36x128xf32> to vector<8x36xf32>
    %9 = vector.broadcast %3 : vector<1x64xf32> to vector<8x64xf32>
    %10 = arith.mulf %1, %9 : vector<8x64xf32>
    %cst_10 = arith.constant dense<0.000000e+00> : vector<8xf32>
    %11 = vector.multi_reduction <add>, %10, %cst_10 [1] : vector<8x64xf32> to vector<8xf32>
    %12 = vector.shape_cast %11 : vector<8xf32> to vector<8x1xf32>
    %13 = vector.broadcast %12 : vector<8x1xf32> to vector<8x36xf32>
    %14 = arith.addf %8, %13 : vector<8x36xf32>
    %15 = vector.broadcast %4 : f32 to vector<8x36xf32>
    %16 = arith.addf %14, %15 : vector<8x36xf32>
    %cst_11 = arith.constant 0.000000e+00 : f32
    %17 = vector.broadcast %cst_11 : f32 to vector<8x36xf32>
    %18 = arith.maximumf %16, %17 : vector<8x36xf32>
    %cst_12 = arith.constant dense<0xFF800000> : vector<8xf32>
    %19 = vector.multi_reduction <maximumf>, %18, %cst_12 [1] : vector<8x36xf32> to vector<8xf32>
    %20 = vector.shape_cast %19 : vector<8xf32> to vector<8x1xf32>
    %21 = vector.broadcast %20 : vector<8x1xf32> to vector<8x36xf32>
    %22 = arith.subf %18, %21 : vector<8x36xf32>
    %23 = math.exp %22 : vector<8x36xf32>
    %cst_13 = arith.constant dense<0.000000e+00> : vector<8xf32>
    %24 = vector.multi_reduction <add>, %23, %cst_13 [1] : vector<8x36xf32> to vector<8xf32>
    %25 = vector.shape_cast %24 : vector<8xf32> to vector<8x1xf32>
    %26 = tpu.reciprocal %25 {approx = true} : vector<8x1xf32> -> vector<8x1xf32>
    %27 = vector.broadcast %26 : vector<8x1xf32> to vector<8x36xf32>
    %28 = arith.mulf %23, %27 : vector<8x36xf32>
    %29 = vector.shape_cast %28 : vector<8x36xf32> to vector<8x36x1xf32>
    %30 = vector.broadcast %29 : vector<8x36x1xf32> to vector<8x36x128xf32>
    %31 = arith.mulf %0, %30 : vector<8x36x128xf32>
    %cst_14 = arith.constant dense<0.000000e+00> : vector<8x128xf32>
    %32 = vector.multi_reduction <add>, %31, %cst_14 [1] : vector<8x36x128xf32> to vector<8x128xf32>
    %c0_15 = arith.constant 0 : index
    %c0_16 = arith.constant 0 : index
    %33 = vector.load %arg6[%c0_15, %c0_16] : memref<8x128xf32, #tpu.memory_space<vmem>>, vector<8x128xf32>
    tpu.vector_store %arg6[%c0_15, %c0_16], %32 {strides = array<i32>} : memref<8x128xf32, #tpu.memory_space<vmem>>, vector<8x128xf32>,
    return
  }
  func.func @transform_0(%arg0: i32) -> (i32, i32, i32) {
    %c0_i32 = arith.constant 0 : i32
    %c0_i32_0 = arith.constant 0 : i32
    %c0_i32_1 = arith.constant 0 : i32
    return %arg0, %c0_i32, %c0_i32_0 : i32, i32, i32
  }
  func.func @transform_1(%arg0: i32) -> (i32, i32) {
    %c0_i32 = arith.constant 0 : i32
    %c0_i32_0 = arith.constant 0 : i32
    return %arg0, %c0_i32 : i32, i32
  }
  func.func @transform_2(%arg0: i32) -> (i32, i32) {
    %c0_i32 = arith.constant 0 : i32
    %c0_i32_0 = arith.constant 0 : i32
    %c0_i32_1 = arith.constant 0 : i32
    return %c0_i32, %c0_i32_0 : i32, i32
  }
  func.func @transform_3(%arg0: i32) -> (i32, i32) {
    %c0_i32 = arith.constant 0 : i32
    %c0_i32_0 = arith.constant 0 : i32
    %c0_i32_1 = arith.constant 0 : i32
    return %c0_i32, %c0_i32_0 : i32, i32
  }
  func.func @transform_4(%arg0: i32) -> (i32, i32) {
    %c0_i32 = arith.constant 0 : i32
    %c0_i32_0 = arith.constant 0 : i32
    %c0_i32_1 = arith.constant 0 : i32
    return %c0_i32, %c0_i32_0 : i32, i32
  }
  func.func @transform_5(%arg0: i32) -> (i32, i32) {
    %c0_i32 = arith.constant 0 : i32
    %c0_i32_0 = arith.constant 0 : i32
    return %arg0, %c0_i32 : i32, i32
  }
}

</mosaic_0001>

<llo_original>
// kernel: tpu_custom_call.1
$region0: #{tpu_custom_call.1}
  #allocation0 [shape = 'u32[]', space=smem, size = 0x4, offset = 0x4, fixed_abs, tag = 'smem constant byte address 0x4 - core index']
  #allocation1 [shape = 'u32[72,128]{1,0:T(1,128)}', space=vmem, size = 0x9000, scoped, tag = 'internal scratch']
  #allocation2 [shape = 'f32[1,1]{1,0:T(1,128)S(6)}', space=smem, size = 0x200, scoped, tag = 'scoped memory for tpu_custom_call.1']
  %s0 = inlined_call_operand.hbm [shape: f32[20,36,128], index: 0, kind: input, shape index: {}]
  %s1 = inlined_call_operand.hbm [shape: f32[20,64], index: 1, kind: input, shape index: {}]
  %s2 = inlined_call_operand.vmem [shape: f32[1,128], index: 2, kind: input, shape index: {}]
  %s3 = inlined_call_operand.vmem [shape: f32[1,64], index: 3, kind: input, shape index: {}]
  %s4 = inlined_call_operand.<no memory space> [shape: f32[1,1], index: 4, kind: input, shape index: {}]
  %s5 = inlined_call_operand.hbm [shape: f32[20,128], index: 5, kind: output, shape index: {}]
  %s6 = sld [smem:[#allocation0]]
  $region61: #{tpu_custom_call.1} parent=0
    _
  %s8 = ssub.s32 1, %s6
  %s9 = scalar_select 0, %s8, %s6
  %10 = sst [smem:[#allocation2]] %s4
  $region1: #{tpu_custom_call.1} parent=0
    #allocation3 [shape = 'u8[327680]{0}', space=vmem, size = 0x50000, scoped, tag = 'input window, operand 0']
    #allocation4 [shape = 's32[2]{0}', space=sflag, size = 0x8, scoped, tag = 'scoped memory for tpu_custom_call.1']
    #allocation5 [shape = 's32[2]{0}', space=sflag, size = 0x8, scoped, tag = 'scoped memory for tpu_custom_call.1']
    #allocation6 [shape = 'u8[8192]{0}', space=vmem, size = 0x2000, scoped, tag = 'input window, operand 1']
    #allocation7 [shape = 's32[2]{0}', space=sflag, size = 0x8, scoped, tag = 'scoped memory for tpu_custom_call.1']
    #allocation8 [shape = 'u8[8192]{0}', space=vmem, size = 0x2000, scoped, tag = 'output window, operand 0']
    %11 = vsyncpa [#allocation4], 0
    %s12 = scalar_lea.sflag [#allocation4], 1
    %13 = vsyncpa %s12, 0
    %14 = vsyncpa [#allocation7], 0
    %s15 = scalar_lea.sflag [#allocation7], 1
    %16 = vsyncpa %s15, 0
    %17 = vsyncpa [#allocation5], 0
    %s18 = scalar_lea.sflag [#allocation5], 1
    %19 = vsyncpa %s18, 0
    loop: start=0, step=1, limit=5
    $region2: #{tpu_custom_call.1} parent=1 // loop_pre_header
      _
    $region3: #{tpu_custom_call.1} parent=1 // loop_header
      %s21 = sphi 0, %s25
      %p22 = scmp.ge.s32.totalorder %s21, 5
      %s31 = sphi 0, %s33
      %s34 = sphi 0, %s31
      %s35 = sphi 0, %s34
      %s51 = sphi 0, %s35
      %s57 = sphi 0, %s59
      %s60 = sphi 0, %s57
      %s61 = sphi 0, %s60
      %s77 = sphi 0, %s61
      %s81 = sphi 0, %s81
      %s83 = sphi 0, %s81
      %s84 = sphi 0, %s83
      %s98 = sphi 0, %s84
      %s102 = sphi 0, %s102
      %s104 = sphi 0, %s102
      %s105 = sphi 0, %s104
      %s119 = sphi 0, %s105
      %s123 = sphi 0, %s123
      %s125 = sphi 0, %s123
      %s126 = sphi 0, %s125
      %s140 = sphi 0, %s126
      %s146 = sphi 0, %s148
      %s149 = sphi 0, %s146
      %s150 = sphi 0, %s149
      %s166 = sphi 0, %s150
    $region4: #{tpu_custom_call.1} parent=1 // loop_header_branch
      %24 = sbr.rel (%p22) target = $region8
    $region5: #{tpu_custom_call.1} parent=1 // loop_body
      %s26 = ssub.s32 %s21, 1
      %s27 = ssub.s32 %s21, 2
      %s28 = sadd.s32 %s21, 1
      %s29 = ssub.s32 %s21, %s28
      %p30 = scmp.eq.s32.totalorder %s29, 0
      %s32 = sadd.s32 %s31, 1
      %s33 = scalar_select %p30, %s31, %s32
      %p36 = pneg %p30
      %p37 = scmp.eq.s32.totalorder %s21, 2
      %p38 = por %p36, %p37
      %p39 = scmp.ne.s32.totalorder %s31, %s34
      %p40 = scmp.eq.s32.totalorder %s21, 0
      %p41 = por %p39, %p40
      %p42 = scmp.ne.s32.totalorder %s31, %s34
      %p43 = scmp.eq.s32.totalorder %s26, 2
      %p44 = por %p42, %p43
      %p45 = scmp.ne.s32.totalorder %s34, %s35
      %p46 = scmp.eq.s32.totalorder %s26, 0
      %p47 = por %p45, %p46
      %p48 = scmp.ne.s32.totalorder %s34, %s35
      %p49 = scmp.eq.s32.totalorder %s27, 2
      %p50 = por %p48, %p49
      %p52 = scmp.ne.s32.totalorder %s35, %s51
      %p53 = scmp.eq.s32.totalorder %s27, 0
      %p54 = por %p52, %p53
      %s55 = ssub.s32 %s21, %s28
      %p56 = scmp.eq.s32.totalorder %s55, 0
      %s58 = sadd.s32 %s57, 1
      %s59 = scalar_select %p56, %s57, %s58
      %p62 = pneg %p56
      %p63 = scmp.eq.s32.totalorder %s21, 2
      %p64 = por %p62, %p63
      %p65 = scmp.ne.s32.totalorder %s57, %s60
      %p66 = scmp.eq.s32.totalorder %s21, 0
      %p67 = por %p65, %p66
      %p68 = scmp.ne.s32.totalorder %s57, %s60
      %p69 = scmp.eq.s32.totalorder %s26, 2
      %p70 = por %p68, %p69
      %p71 = scmp.ne.s32.totalorder %s60, %s61
      %p72 = scmp.eq.s32.totalorder %s26, 0
      %p73 = por %p71, %p72
      %p74 = scmp.ne.s32.totalorder %s60, %s61
      %p75 = scmp.eq.s32.totalorder %s27, 2
      %p76 = por %p74, %p75
      %p78 = scmp.ne.s32.totalorder %s61, %s77
      %p79 = scmp.eq.s32.totalorder %s27, 0
      %p80 = por %p78, %p79
      %s82 = sadd.s32 %s81, 1
      %p85 = scmp.eq.s32.totalorder %s21, 2
      %p86 = scmp.ne.s32.totalorder %s81, %s83
      %p87 = scmp.eq.s32.totalorder %s21, 0
      %p88 = por %p86, %p87
      %p89 = scmp.ne.s32.totalorder %s81, %s83
      %p90 = scmp.eq.s32.totalorder %s26, 2
      %p91 = por %p89, %p90
      %p92 = scmp.ne.s32.totalorder %s83, %s84
      %p93 = scmp.eq.s32.totalorder %s26, 0
      %p94 = por %p92, %p93
      %p95 = scmp.ne.s32.totalorder %s83, %s84
      %p96 = scmp.eq.s32.totalorder %s27, 2
      %p97 = por %p95, %p96
      %p99 = scmp.ne.s32.totalorder %s84, %s98
      %p100 = scmp.eq.s32.totalorder %s27, 0
      %p101 = por %p99, %p100
      %s103 = sadd.s32 %s102, 1
      %p106 = scmp.eq.s32.totalorder %s21, 2
      %p107 = scmp.ne.s32.totalorder %s102, %s104
      %p108 = scmp.eq.s32.totalorder %s21, 0
      %p109 = por %p107, %p108
      %p110 = scmp.ne.s32.totalorder %s102, %s104
      %p111 = scmp.eq.s32.totalorder %s26, 2
      %p112 = por %p110, %p111
      %p113 = scmp.ne.s32.totalorder %s104, %s105
      %p114 = scmp.eq.s32.totalorder %s26, 0
      %p115 = por %p113, %p114
      %p116 = scmp.ne.s32.totalorder %s104, %s105
      %p117 = scmp.eq.s32.totalorder %s27, 2
      %p118 = por %p116, %p117
      %p120 = scmp.ne.s32.totalorder %s105, %s119
      %p121 = scmp.eq.s32.totalorder %s27, 0
      %p122 = por %p120, %p121
      %s124 = sadd.s32 %s123, 1
      %p127 = scmp.eq.s32.totalorder %s21, 2
      %p128 = scmp.ne.s32.totalorder %s123, %s125
      %p129 = scmp.eq.s32.totalorder %s21, 0
      %p130 = por %p128, %p129
      %p131 = scmp.ne.s32.totalorder %s123, %s125
      %p132 = scmp.eq.s32.totalorder %s26, 2
      %p133 = por %p131, %p132
      %p134 = scmp.ne.s32.totalorder %s125, %s126
      %p135 = scmp.eq.s32.totalorder %s26, 0
      %p136 = por %p134, %p135
      %p137 = scmp.ne.s32.totalorder %s125, %s126
      %p138 = scmp.eq.s32.totalorder %s27, 2
      %p139 = por %p137, %p138
      %p141 = scmp.ne.s32.totalorder %s126, %s140
      %p142 = scmp.eq.s32.totalorder %s27, 0
      %p143 = por %p141, %p142
      %s144 = ssub.s32 %s21, %s28
      %p145 = scmp.eq.s32.totalorder %s144, 0
      %s147 = sadd.s32 %s146, 1
      %s148 = scalar_select %p145, %s146, %s147
      %p151 = pneg %p145
      %p152 = scmp.eq.s32.totalorder %s21, 2
      %p153 = por %p151, %p152
      %p154 = scmp.ne.s32.totalorder %s146, %s149
      %p155 = scmp.eq.s32.totalorder %s21, 0
      %p156 = por %p154, %p155
      %p157 = scmp.ne.s32.totalorder %s146, %s149
      %p158 = scmp.eq.s32.totalorder %s26, 2
      %p159 = por %p157, %p158
      %p160 = scmp.ne.s32.totalorder %s149, %s150
      %p161 = scmp.eq.s32.totalorder %s26, 0
      %p162 = por %p160, %p161
      %p163 = scmp.ne.s32.totalorder %s149, %s150
      %p164 = scmp.eq.s32.totalorder %s27, 2
      %p165 = por %p163, %p164
      %p167 = scmp.ne.s32.totalorder %s150, %s166
      %p168 = scmp.eq.s32.totalorder %s27, 0
      %p169 = por %p167, %p168
      %p170 = scmp.le.s32.totalorder 1, %s21
      %p171 = scmp.lt.s32.totalorder %s21, 4
      %p172 = pnand %p170, %p171
      %p173 = pneg %p172
      // Predicated region
      $region9: #{tpu_custom_call.1} parent=5 // pred_check
        _
      $region10: #{tpu_custom_call.1} parent=5 // pred_check_branch
        %175 = sbr.rel (%p172) target = $region12
      $region11: #{tpu_custom_call.1} parent=5 // pred_region
        %s176 = ssub.s32 %s21, 1
        // Predicated region
        $region13: #{tpu_custom_call.1} parent=11 // pred_check
          %p177 = pneg %p94
        $region14: #{tpu_custom_call.1} parent=11 // pred_check_branch
          %179 = sbr.rel (%p177) target = $region16
        $region15: #{tpu_custom_call.1} parent=11 // pred_region
          _
        $region16: #{tpu_custom_call.1} parent=11 // pred_fallthru
          _
        // Predicated region
        $region17: #{tpu_custom_call.1} parent=11 // pred_check
          %p180 = pneg %p115
        $region18: #{tpu_custom_call.1} parent=11 // pred_check_branch
          %182 = sbr.rel (%p180) target = $region20
        $region19: #{tpu_custom_call.1} parent=11 // pred_region
          _
        $region20: #{tpu_custom_call.1} parent=11 // pred_fallthru
          _
        // Predicated region
        $region21: #{tpu_custom_call.1} parent=11 // pred_check
          %p183 = pneg %p136
        $region22: #{tpu_custom_call.1} parent=11 // pred_check_branch
          %185 = sbr.rel (%p183) target = $region24
        $region23: #{tpu_custom_call.1} parent=11 // pred_region
          _
        $region24: #{tpu_custom_call.1} parent=11 // pred_fallthru
          _
      $region12: #{tpu_custom_call.1} parent=5 // pred_fallthru
        _
      %p186 = scmp.lt.s32.totalorder %s21, 3
      // Predicated region
      $region25: #{tpu_custom_call.1} parent=5 // pred_check
        %p187 = pneg %p186
      $region26: #{tpu_custom_call.1} parent=5 // pred_check_branch
        %189 = sbr.rel (%p187) target = $region28
      $region27: #{tpu_custom_call.1} parent=5 // pred_region
        // Predicated region
        $region29: #{tpu_custom_call.1} parent=27 // pred_check
          %p190 = pneg %p41
        $region30: #{tpu_custom_call.1} parent=27 // pred_check_branch
          %192 = sbr.rel (%p190) target = $region32
        $region31: #{tpu_custom_call.1} parent=27 // pred_region
          %s193 = sand.u32 %s31, 1
          %s194 = scalar_lea.sflag [#allocation4], %s193
          %s195 = sand.u32 %s31, 1
          %s196 = smul.addr %s195, 320
          %s197 = scalar_lea.vmem [#allocation3], %s196
          %s198 = smul.u32 8, %s21
          %s199 = ssub.s32 20, %s198
          %p200 = scmp.lt.s32.totalorder %s199, 8
          %s201 = scalar_select %p200, %s199, 8
          %s202 = smul.u32 8, %s201
          %s203 = smul.u32 %s202, 5
          %s204 = ssub.s32 320, %s203
          %s205 = sshll.u32 %s204, 4
          %206 = vsyncadd %s194, %s205
          %p207 = scmp.ne.s32.totalorder 0, %s203
          %s208 = smul.addr %s198, 5
          %s209 = smul.addr %s208, 8
          %s210 = scalar_lea.hbm %s0, %s209
          %s211 = smul.u32 %s201, 5
          %s212 = smul.u32 8, %s211
          %s213 = sshll.u32 %s210, 4
          %s214 = int_to_ptr.hbm [resolvable:$true] %s213
          %s215 = sshll.u32 %s197, 4
          %s216 = int_to_ptr.vmem [resolvable:$true] %s215
          %s217 = sshll.u32 %s212, 4
          %221 = dma.hbm_to_vmem [thread:$0]  (%p207), %s214, %s217, %s216, %s194, 128, 128, 8
        $region32: #{tpu_custom_call.1} parent=27 // pred_fallthru
          _
        // Predicated region
        $region33: #{tpu_custom_call.1} parent=27 // pred_check
          %p222 = pneg %p67
        $region34: #{tpu_custom_call.1} parent=27 // pred_check_branch
          %224 = sbr.rel (%p222) target = $region36
        $region35: #{tpu_custom_call.1} parent=27 // pred_region
          %s225 = sand.u32 %s57, 1
          %s226 = scalar_lea.sflag [#allocation7], %s225
          %s227 = sand.u32 %s57, 1
          %s228 = smul.addr %s227, 8
          %s229 = scalar_lea.vmem [#allocation6], %s228
          %231 = vsyncadd %s226, 0
          %s232 = smul.addr %s21, 8
          %s233 = scalar_lea.hbm %s1, %s232
          %s235 = sshll.u32 %s233, 4
          %s236 = int_to_ptr.hbm [resolvable:$true] %s235
          %s237 = sshll.u32 %s229, 4
          %s238 = int_to_ptr.vmem [resolvable:$true] %s237
          %240 = dma.hbm_to_vmem [thread:$0]  %s236, 128, %s238, %s226
        $region36: #{tpu_custom_call.1} parent=27 // pred_fallthru
          _
      $region28: #{tpu_custom_call.1} parent=5 // pred_fallthru
        _
      %p241 = scmp.le.s32.totalorder 1, %s21
      %p242 = scmp.lt.s32.totalorder %s21, 4
      %p243 = pnand %p241, %p242
      %p244 = pneg %p243
      // Predicated region
      $region37: #{tpu_custom_call.1} parent=5 // pred_check
        _
      $region38: #{tpu_custom_call.1} parent=5 // pred_check_branch
        %246 = sbr.rel (%p243) target = $region40
      $region39: #{tpu_custom_call.1} parent=5 // pred_region
        %s247 = ssub.s32 %s21, 1
        %s248 = sand.u32 %s34, 1
        %s249 = scalar_lea.sflag [#allocation4], %s248
        %s250 = sand.u32 %s34, 1
        %s251 = smul.addr %s250, 320
        %s252 = scalar_lea.vmem [#allocation3], %s251
        // Predicated region
        $region41: #{tpu_custom_call.1} parent=39 // pred_check
          %p253 = pneg %p47
        $region42: #{tpu_custom_call.1} parent=39 // pred_check_branch
          %255 = sbr.rel (%p253) target = $region44
        $region43: #{tpu_custom_call.1} parent=39 // pred_region
          %257 = dma.done %s249, 5120
        $region44: #{tpu_custom_call.1} parent=39 // pred_fallthru
          _
        %s258 = sand.u32 %s60, 1
        %s259 = scalar_lea.sflag [#allocation7], %s258
        %s260 = sand.u32 %s60, 1
        %s261 = smul.addr %s260, 8
        %s262 = scalar_lea.vmem [#allocation6], %s261
        // Predicated region
        $region45: #{tpu_custom_call.1} parent=39 // pred_check
          %p263 = pneg %p73
        $region46: #{tpu_custom_call.1} parent=39 // pred_check_branch
          %265 = sbr.rel (%p263) target = $region48
        $region47: #{tpu_custom_call.1} parent=39 // pred_region
          %267 = dma.done %s259, 128
        $region48: #{tpu_custom_call.1} parent=39 // pred_fallthru
          _
        %s268 = sand.u32 %s34, 1
        %s269 = scalar_lea.sflag [#allocation4], %s268
        %s270 = sand.u32 %s34, 1
        %s271 = smul.addr %s270, 320
        %s272 = scalar_lea.vmem [#allocation3], %s271
        %p273 = pneg %p47
        %p274 = pneg %p44
        %s275 = sand.u32 %s60, 1
        %s276 = scalar_lea.sflag [#allocation7], %s275
        %s277 = sand.u32 %s60, 1
        %s278 = smul.addr %s277, 8
        %s279 = scalar_lea.vmem [#allocation6], %s278
        %p280 = pneg %p73
        %p281 = pneg %p70
        %p282 = pneg %p94
        %p283 = pneg %p91
        %p284 = pneg %p115
        %p285 = pneg %p112
        %p286 = pneg %p136
        %p287 = pneg %p133
        %p288 = pneg %p162
        %p289 = pneg %p159
        %s290 = sand.u32 %s149, 1
        %s291 = scalar_lea.sflag [#allocation5], %s290
        %s292 = sand.u32 %s149, 1
        %s293 = smul.addr %s292, 8
        %s294 = scalar_lea.vmem [#allocation8], %s293
        %s295 = smul.u32 8, %s26
        %s296 = ssub.s32 20, %s295
        %p297 = scmp.lt.s32.totalorder %s296, 8
        %s298 = scalar_select %p297, %s296, 8
        %s299 = smul.u32 8, %s298
        %s300 = smul.u32 %s299, 5
        %v301 = vld [vmem:[%s252] sm:$0xff]
        %v302 = vld [vmem:[%s252 + $0x8] sm:$0xff]
        %v303 = vld [vmem:[%s252 + $0x10] sm:$0xff]
        %v304 = vld [vmem:[%s252 + $0x18] sm:$0xff]
        %v305 = vld [vmem:[%s252 + $0x20] sm:$0xf]
        %v306 = vld [vmem:[%s252 + $0x28] sm:$0xff]
        %v307 = vld [vmem:[%s252 + $0x30] sm:$0xff]
        %v308 = vld [vmem:[%s252 + $0x38] sm:$0xff]
        %v309 = vld [vmem:[%s252 + $0x40] sm:$0xff]
        %v310 = vld [vmem:[%s252 + $0x48] sm:$0xf]
        %v311 = vld [vmem:[%s252 + $0x50] sm:$0xff]
        %v312 = vld [vmem:[%s252 + $0x58] sm:$0xff]
        %v313 = vld [vmem:[%s252 + $0x60] sm:$0xff]
        %v314 = vld [vmem:[%s252 + $0x68] sm:$0xff]
        %v315 = vld [vmem:[%s252 + $0x70] sm:$0xf]
        %v316 = vld [vmem:[%s252 + $0x78] sm:$0xff]
        %v317 = vld [vmem:[%s252 + $0x80] sm:$0xff]
        %v318 = vld [vmem:[%s252 + $0x88] sm:$0xff]
        %v319 = vld [vmem:[%s252 + $0x90] sm:$0xff]
        %v320 = vld [vmem:[%s252 + $0x98] sm:$0xf]
        %v321 = vld [vmem:[%s252 + $0xa0] sm:$0xff]
        %v322 = vld [vmem:[%s252 + $0xa8] sm:$0xff]
        %v323 = vld [vmem:[%s252 + $0xb0] sm:$0xff]
        %v324 = vld [vmem:[%s252 + $0xb8] sm:$0xff]
        %v325 = vld [vmem:[%s252 + $0xc0] sm:$0xf]
        %v326 = vld [vmem:[%s252 + $0xc8] sm:$0xff]
        %v327 = vld [vmem:[%s252 + $0xd0] sm:$0xff]
        %v328 = vld [vmem:[%s252 + $0xd8] sm:$0xff]
        %v329 = vld [vmem:[%s252 + $0xe0] sm:$0xff]
        %v330 = vld [vmem:[%s252 + $0xe8] sm:$0xf]
        %v331 = vld [vmem:[%s252 + $0xf0] sm:$0xff]
        %v332 = vld [vmem:[%s252 + $0xf8] sm:$0xff]
        %v333 = vld [vmem:[%s252 + $0x100] sm:$0xff]
        %v334 = vld [vmem:[%s252 + $0x108] sm:$0xff]
        %v335 = vld [vmem:[%s252 + $0x110] sm:$0xf]
        %v336 = vld [vmem:[%s252 + $0x118] sm:$0xff]
        %v337 = vld [vmem:[%s252 + $0x120] sm:$0xff]
        %v338 = vld [vmem:[%s252 + $0x128] sm:$0xff]
        %v339 = vld [vmem:[%s252 + $0x130] sm:$0xff]
        %v340 = vld [vmem:[%s252 + $0x138] sm:$0xf]
        %v341 = vld [vmem:[%s262] sm:$0xff]
        %v342 = vld [vmem:[%s2] sm:$0x1]
        %v343 = vld [vmem:[%s3] sm:$0x1]
        %s344 = sld [smem:[#allocation2]]
        %v346 = vperm.slane %v342, 0
        %v348 = vmul.f32 %v301, %v346
        %v349 = vmul.f32 %v302, %v346
        %v350 = vmul.f32 %v303, %v346
        %v351 = vmul.f32 %v304, %v346
        %v352 = vmul.f32 %v305, %v346
        %v353 = vmul.f32 %v306, %v346
        %v354 = vmul.f32 %v307, %v346
        %v355 = vmul.f32 %v308, %v346
        %v356 = vmul.f32 %v309, %v346
        %v357 = vmul.f32 %v310, %v346
        %v358 = vmul.f32 %v311, %v346
        %v359 = vmul.f32 %v312, %v346
        %v360 = vmul.f32 %v313, %v346
        %v361 = vmul.f32 %v314, %v346
        %v362 = vmul.f32 %v315, %v346
        %v363 = vmul.f32 %v316, %v346
        %v364 = vmul.f32 %v317, %v346
        %v365 = vmul.f32 %v318, %v346
        %v366 = vmul.f32 %v319, %v346
        %v367 = vmul.f32 %v320, %v346
        %v368 = vmul.f32 %v321, %v346
        %v369 = vmul.f32 %v322, %v346
        %v370 = vmul.f32 %v323, %v346
        %v371 = vmul.f32 %v324, %v346
        %v372 = vmul.f32 %v325, %v346
        %v373 = vmul.f32 %v326, %v346
        %v374 = vmul.f32 %v327, %v346
        %v375 = vmul.f32 %v328, %v346
        %v376 = vmul.f32 %v329, %v346
        %v377 = vmul.f32 %v330, %v346
        %v378 = vmul.f32 %v331, %v346
        %v379 = vmul.f32 %v332, %v346
        %v380 = vmul.f32 %v333, %v346
        %v381 = vmul.f32 %v334, %v346
        %v382 = vmul.f32 %v335, %v346
        %v383 = vmul.f32 %v336, %v346
        %v384 = vmul.f32 %v337, %v346
        %v385 = vmul.f32 %v338, %v346
        %v386 = vmul.f32 %v339, %v346
        %v387 = vmul.f32 %v340, %v346
        %388 = vadd.xlane.f32.xlu0 %v348
        %v389 = vpop.xlane.xlu0 %388
        %390 = vadd.xlane.f32.xlu0 %v349
        %v391 = vpop.xlane.xlu0 %390
        %392 = vadd.xlane.f32.xlu0 %v350
        %v393 = vpop.xlane.xlu0 %392
        %394 = vadd.xlane.f32.xlu0 %v351
        %v395 = vpop.xlane.xlu0 %394
        %vm396 = vcmask 1043456
        %v397 = vsel %vm396, %v352, 0.0
        %398 = vadd.xlane.f32.xlu0 %v397
        %v399 = vpop.xlane.xlu0 %398
        %400 = vadd.xlane.f32.xlu0 %v353
        %v401 = vpop.xlane.xlu0 %400
        %402 = vadd.xlane.f32.xlu0 %v354
        %v403 = vpop.xlane.xlu0 %402
        %404 = vadd.xlane.f32.xlu0 %v355
        %v405 = vpop.xlane.xlu0 %404
        %406 = vadd.xlane.f32.xlu0 %v356
        %v407 = vpop.xlane.xlu0 %406
        %v408 = vsel %vm396, %v357, 0.0
        %409 = vadd.xlane.f32.xlu0 %v408
        %v410 = vpop.xlane.xlu0 %409
        %411 = vadd.xlane.f32.xlu0 %v358
        %v412 = vpop.xlane.xlu0 %411
        %413 = vadd.xlane.f32.xlu0 %v359
        %v414 = vpop.xlane.xlu0 %413
        %415 = vadd.xlane.f32.xlu0 %v360
        %v416 = vpop.xlane.xlu0 %415
        %417 = vadd.xlane.f32.xlu0 %v361
        %v418 = vpop.xlane.xlu0 %417
        %v419 = vsel %vm396, %v362, 0.0
        %420 = vadd.xlane.f32.xlu0 %v419
        %v421 = vpop.xlane.xlu0 %420
        %422 = vadd.xlane.f32.xlu0 %v363
        %v423 = vpop.xlane.xlu0 %422
        %424 = vadd.xlane.f32.xlu0 %v364
        %v425 = vpop.xlane.xlu0 %424
        %426 = vadd.xlane.f32.xlu0 %v365
        %v427 = vpop.xlane.xlu0 %426
        %428 = vadd.xlane.f32.xlu0 %v366
        %v429 = vpop.xlane.xlu0 %428
        %v430 = vsel %vm396, %v367, 0.0
        %431 = vadd.xlane.f32.xlu0 %v430
        %v432 = vpop.xlane.xlu0 %431
        %433 = vadd.xlane.f32.xlu0 %v368
        %v434 = vpop.xlane.xlu0 %433
        %435 = vadd.xlane.f32.xlu0 %v369
        %v436 = vpop.xlane.xlu0 %435
        %437 = vadd.xlane.f32.xlu0 %v370
        %v438 = vpop.xlane.xlu0 %437
        %439 = vadd.xlane.f32.xlu0 %v371
        %v440 = vpop.xlane.xlu0 %439
        %v441 = vsel %vm396, %v372, 0.0
        %442 = vadd.xlane.f32.xlu0 %v441
        %v443 = vpop.xlane.xlu0 %442
        %444 = vadd.xlane.f32.xlu0 %v373
        %v445 = vpop.xlane.xlu0 %444
        %446 = vadd.xlane.f32.xlu0 %v374
        %v447 = vpop.xlane.xlu0 %446
        %448 = vadd.xlane.f32.xlu0 %v375
        %v449 = vpop.xlane.xlu0 %448
        %450 = vadd.xlane.f32.xlu0 %v376
        %v451 = vpop.xlane.xlu0 %450
        %v452 = vsel %vm396, %v377, 0.0
        %453 = vadd.xlane.f32.xlu0 %v452
        %v454 = vpop.xlane.xlu0 %453
        %455 = vadd.xlane.f32.xlu0 %v378
        %v456 = vpop.xlane.xlu0 %455
        %457 = vadd.xlane.f32.xlu0 %v379
        %v458 = vpop.xlane.xlu0 %457
        %459 = vadd.xlane.f32.xlu0 %v380
        %v460 = vpop.xlane.xlu0 %459
        %461 = vadd.xlane.f32.xlu0 %v381
        %v462 = vpop.xlane.xlu0 %461
        %v463 = vsel %vm396, %v382, 0.0
        %464 = vadd.xlane.f32.xlu0 %v463
        %v465 = vpop.xlane.xlu0 %464
        %466 = vadd.xlane.f32.xlu0 %v383
        %v467 = vpop.xlane.xlu0 %466
        %468 = vadd.xlane.f32.xlu0 %v384
        %v469 = vpop.xlane.xlu0 %468
        %470 = vadd.xlane.f32.xlu0 %v385
        %v471 = vpop.xlane.xlu0 %470
        %472 = vadd.xlane.f32.xlu0 %v386
        %v473 = vpop.xlane.xlu0 %472
        %v474 = vsel %vm396, %v387, 0.0
        %475 = vadd.xlane.f32.xlu0 %v474
        %v476 = vpop.xlane.xlu0 %475
        %v478 = vperm.slane %v343, 0
        %v480 = vmul.f32 %v341, %v478
        %vm481 = vcmask 523264
        %v482 = vsel %vm481, %v480, 0.0
        %483 = vadd.xlane.f32.xlu0 %v482
        %v484 = vpop.xlane.xlu0 %483
        %v486 = vperm.slane %v484, 0
        %v487 = vperm.slane %v484, 1
        %v488 = vperm.slane %v484, 2
        %v489 = vperm.slane %v484, 3
        %v490 = vperm.slane %v484, 4
        %v491 = vperm.slane %v484, 5
        %v492 = vperm.slane %v484, 6
        %v493 = vperm.slane %v484, 7
        %v502 = vadd.f32 %v389, %v486
        %v503 = vadd.f32 %v391, %v486
        %v504 = vadd.f32 %v393, %v486
        %v505 = vadd.f32 %v395, %v486
        %v506 = vadd.f32 %v399, %v486
        %v507 = vadd.f32 %v401, %v487
        %v508 = vadd.f32 %v403, %v487
        %v509 = vadd.f32 %v405, %v487
        %v510 = vadd.f32 %v407, %v487
        %v511 = vadd.f32 %v410, %v487
        %v512 = vadd.f32 %v412, %v488
        %v513 = vadd.f32 %v414, %v488
        %v514 = vadd.f32 %v416, %v488
        %v515 = vadd.f32 %v418, %v488
        %v516 = vadd.f32 %v421, %v488
        %v517 = vadd.f32 %v423, %v489
        %v518 = vadd.f32 %v425, %v489
        %v519 = vadd.f32 %v427, %v489
        %v520 = vadd.f32 %v429, %v489
        %v521 = vadd.f32 %v432, %v489
        %v522 = vadd.f32 %v434, %v490
        %v523 = vadd.f32 %v436, %v490
        %v524 = vadd.f32 %v438, %v490
        %v525 = vadd.f32 %v440, %v490
        %v526 = vadd.f32 %v443, %v490
        %v527 = vadd.f32 %v445, %v491
        %v528 = vadd.f32 %v447, %v491
        %v529 = vadd.f32 %v449, %v491
        %v530 = vadd.f32 %v451, %v491
        %v531 = vadd.f32 %v454, %v491
        %v532 = vadd.f32 %v456, %v492
        %v533 = vadd.f32 %v458, %v492
        %v534 = vadd.f32 %v460, %v492
        %v535 = vadd.f32 %v462, %v492
        %v536 = vadd.f32 %v465, %v492
        %v537 = vadd.f32 %v467, %v493
        %v538 = vadd.f32 %v469, %v493
        %v539 = vadd.f32 %v471, %v493
        %v540 = vadd.f32 %v473, %v493
        %v541 = vadd.f32 %v476, %v493
        %v542 = vstv %s344
        %v543 = vadd.f32 %v502, %v542
        %v544 = vadd.f32 %v503, %v542
        %v545 = vadd.f32 %v504, %v542
        %v546 = vadd.f32 %v505, %v542
        %v547 = vadd.f32 %v506, %v542
        %v548 = vadd.f32 %v507, %v542
        %v549 = vadd.f32 %v508, %v542
        %v550 = vadd.f32 %v509, %v542
        %v551 = vadd.f32 %v510, %v542
        %v552 = vadd.f32 %v511, %v542
        %v553 = vadd.f32 %v512, %v542
        %v554 = vadd.f32 %v513, %v542
        %v555 = vadd.f32 %v514, %v542
        %v556 = vadd.f32 %v515, %v542
        %v557 = vadd.f32 %v516, %v542
        %v558 = vadd.f32 %v517, %v542
        %v559 = vadd.f32 %v518, %v542
        %v560 = vadd.f32 %v519, %v542
        %v561 = vadd.f32 %v520, %v542
        %v562 = vadd.f32 %v521, %v542
        %v563 = vadd.f32 %v522, %v542
        %v564 = vadd.f32 %v523, %v542
        %v565 = vadd.f32 %v524, %v542
        %v566 = vadd.f32 %v525, %v542
        %v567 = vadd.f32 %v526, %v542
        %v568 = vadd.f32 %v527, %v542
        %v569 = vadd.f32 %v528, %v542
        %v570 = vadd.f32 %v529, %v542
        %v571 = vadd.f32 %v530, %v542
        %v572 = vadd.f32 %v531, %v542
        %v573 = vadd.f32 %v532, %v542
        %v574 = vadd.f32 %v533, %v542
        %v575 = vadd.f32 %v534, %v542
        %v576 = vadd.f32 %v535, %v542
        %v577 = vadd.f32 %v536, %v542
        %v578 = vadd.f32 %v537, %v542
        %v579 = vadd.f32 %v538, %v542
        %v580 = vadd.f32 %v539, %v542
        %v581 = vadd.f32 %v540, %v542
        %v582 = vadd.f32 %v541, %v542
        %v583 = vmax.f32 %v543, 0.0
        %v584 = vmax.f32 %v544, 0.0
        %v585 = vmax.f32 %v545, 0.0
        %v586 = vmax.f32 %v546, 0.0
        %v587 = vmax.f32 %v547, 0.0
        %v588 = vmax.f32 %v548, 0.0
        %v589 = vmax.f32 %v549, 0.0
        %v590 = vmax.f32 %v550, 0.0
        %v591 = vmax.f32 %v551, 0.0
        %v592 = vmax.f32 %v552, 0.0
        %v593 = vmax.f32 %v553, 0.0
        %v594 = vmax.f32 %v554, 0.0
        %v595 = vmax.f32 %v555, 0.0
        %v596 = vmax.f32 %v556, 0.0
        %v597 = vmax.f32 %v557, 0.0
        %v598 = vmax.f32 %v558, 0.0
        %v599 = vmax.f32 %v559, 0.0
        %v600 = vmax.f32 %v560, 0.0
        %v601 = vmax.f32 %v561, 0.0
        %v602 = vmax.f32 %v562, 0.0
        %v603 = vmax.f32 %v563, 0.0
        %v604 = vmax.f32 %v564, 0.0
        %v605 = vmax.f32 %v565, 0.0
        %v606 = vmax.f32 %v566, 0.0
        %v607 = vmax.f32 %v567, 0.0
        %v608 = vmax.f32 %v568, 0.0
        %v609 = vmax.f32 %v569, 0.0
        %v610 = vmax.f32 %v570, 0.0
        %v611 = vmax.f32 %v571, 0.0
        %v612 = vmax.f32 %v572, 0.0
        %v613 = vmax.f32 %v573, 0.0
        %v614 = vmax.f32 %v574, 0.0
        %v615 = vmax.f32 %v575, 0.0
        %v616 = vmax.f32 %v576, 0.0
        %v617 = vmax.f32 %v577, 0.0
        %v618 = vmax.f32 %v578, 0.0
        %v619 = vmax.f32 %v579, 0.0
        %v620 = vmax.f32 %v580, 0.0
        %v621 = vmax.f32 %v581, 0.0
        %v622 = vmax.f32 %v582, 0.0
        %663 = vset.pattern.permute.xlu0 0
        %664 = vperm.xlu0 %663, %v583
        %v665 = vpop.permute.xlu0 %664
        %666 = vset.pattern.permute.xlu0 0
        %667 = vperm.xlu0 %666, %v584
        %v668 = vpop.permute.xlu0 %667
        %669 = vset.pattern.permute.xlu0 0
        %670 = vperm.xlu0 %669, %v585
        %v671 = vpop.permute.xlu0 %670
        %672 = vset.pattern.permute.xlu0 0
        %673 = vperm.xlu0 %672, %v586
        %v674 = vpop.permute.xlu0 %673
        %675 = vset.pattern.permute.xlu0 0
        %676 = vperm.xlu0 %675, %v587
        %v677 = vpop.permute.xlu0 %676
        %678 = vset.pattern.permute.xlu0 0
        %679 = vperm.xlu0 %678, %v588
        %v680 = vpop.permute.xlu0 %679
        %681 = vset.pattern.permute.xlu0 0
        %682 = vperm.xlu0 %681, %v589
        %v683 = vpop.permute.xlu0 %682
        %684 = vset.pattern.permute.xlu0 0
        %685 = vperm.xlu0 %684, %v590
        %v686 = vpop.permute.xlu0 %685
        %687 = vset.pattern.permute.xlu0 0
        %688 = vperm.xlu0 %687, %v591
        %v689 = vpop.permute.xlu0 %688
        %690 = vset.pattern.permute.xlu0 0
        %691 = vperm.xlu0 %690, %v592
        %v692 = vpop.permute.xlu0 %691
        %693 = vset.pattern.permute.xlu0 0
        %694 = vperm.xlu0 %693, %v593
        %v695 = vpop.permute.xlu0 %694
        %696 = vset.pattern.permute.xlu0 0
        %697 = vperm.xlu0 %696, %v594
        %v698 = vpop.permute.xlu0 %697
        %699 = vset.pattern.permute.xlu0 0
        %700 = vperm.xlu0 %699, %v595
        %v701 = vpop.permute.xlu0 %700
        %702 = vset.pattern.permute.xlu0 0
        %703 = vperm.xlu0 %702, %v596
        %v704 = vpop.permute.xlu0 %703
        %705 = vset.pattern.permute.xlu0 0
        %706 = vperm.xlu0 %705, %v597
        %v707 = vpop.permute.xlu0 %706
        %708 = vset.pattern.permute.xlu0 0
        %709 = vperm.xlu0 %708, %v598
        %v710 = vpop.permute.xlu0 %709
        %711 = vset.pattern.permute.xlu0 0
        %712 = vperm.xlu0 %711, %v599
        %v713 = vpop.permute.xlu0 %712
        %714 = vset.pattern.permute.xlu0 0
        %715 = vperm.xlu0 %714, %v600
        %v716 = vpop.permute.xlu0 %715
        %717 = vset.pattern.permute.xlu0 0
        %718 = vperm.xlu0 %717, %v601
        %v719 = vpop.permute.xlu0 %718
        %720 = vset.pattern.permute.xlu0 0
        %721 = vperm.xlu0 %720, %v602
        %v722 = vpop.permute.xlu0 %721
        %723 = vset.pattern.permute.xlu0 0
        %724 = vperm.xlu0 %723, %v603
        %v725 = vpop.permute.xlu0 %724
        %726 = vset.pattern.permute.xlu0 0
        %727 = vperm.xlu0 %726, %v604
        %v728 = vpop.permute.xlu0 %727
        %729 = vset.pattern.permute.xlu0 0
        %730 = vperm.xlu0 %729, %v605
        %v731 = vpop.permute.xlu0 %730
        %732 = vset.pattern.permute.xlu0 0
        %733 = vperm.xlu0 %732, %v606
        %v734 = vpop.permute.xlu0 %733
        %735 = vset.pattern.permute.xlu0 0
        %736 = vperm.xlu0 %735, %v607
        %v737 = vpop.permute.xlu0 %736
        %738 = vset.pattern.permute.xlu0 0
        %739 = vperm.xlu0 %738, %v608
        %v740 = vpop.permute.xlu0 %739
        %741 = vset.pattern.permute.xlu0 0
        %742 = vperm.xlu0 %741, %v609
        %v743 = vpop.permute.xlu0 %742
        %744 = vset.pattern.permute.xlu0 0
        %745 = vperm.xlu0 %744, %v610
        %v746 = vpop.permute.xlu0 %745
        %747 = vset.pattern.permute.xlu0 0
        %748 = vperm.xlu0 %747, %v611
        %v749 = vpop.permute.xlu0 %748
        %750 = vset.pattern.permute.xlu0 0
        %751 = vperm.xlu0 %750, %v612
        %v752 = vpop.permute.xlu0 %751
        %753 = vset.pattern.permute.xlu0 0
        %754 = vperm.xlu0 %753, %v613
        %v755 = vpop.permute.xlu0 %754
        %756 = vset.pattern.permute.xlu0 0
        %757 = vperm.xlu0 %756, %v614
        %v758 = vpop.permute.xlu0 %757
        %759 = vset.pattern.permute.xlu0 0
        %760 = vperm.xlu0 %759, %v615
        %v761 = vpop.permute.xlu0 %760
        %762 = vset.pattern.permute.xlu0 0
        %763 = vperm.xlu0 %762, %v616
        %v764 = vpop.permute.xlu0 %763
        %765 = vset.pattern.permute.xlu0 0
        %766 = vperm.xlu0 %765, %v617
        %v767 = vpop.permute.xlu0 %766
        %768 = vset.pattern.permute.xlu0 0
        %769 = vperm.xlu0 %768, %v618
        %v770 = vpop.permute.xlu0 %769
        %771 = vset.pattern.permute.xlu0 0
        %772 = vperm.xlu0 %771, %v619
        %v773 = vpop.permute.xlu0 %772
        %774 = vset.pattern.permute.xlu0 0
        %775 = vperm.xlu0 %774, %v620
        %v776 = vpop.permute.xlu0 %775
        %777 = vset.pattern.permute.xlu0 0
        %778 = vperm.xlu0 %777, %v621
        %v779 = vpop.permute.xlu0 %778
        %780 = vset.pattern.permute.xlu0 0
        %781 = vperm.xlu0 %780, %v622
        %v782 = vpop.permute.xlu0 %781
        %v783 = vlaneseq
        %v784 = vand.u32 %v783, 127
        %v785 = vperm.slane %v665, %v784
        %v786 = vadd.s32 %v784, 4294967288
        %v787 = vperm.slane %v668, %v786
        %vm788 = vcmask 130112
        %v789 = vsel %vm788, %v787, %v785
        %v790 = vadd.s32 %v784, 4294967280
        %v791 = vperm.slane %v671, %v790
        %vm792 = vcmask 195712
        %v793 = vsel %vm792, %v791, %v789
        %v794 = vadd.s32 %v784, 4294967272
        %v795 = vperm.slane %v674, %v794
        %vm796 = vcmask 261312
        %v797 = vsel %vm796, %v795, %v793
        %v798 = vadd.s32 %v784, 4294967264
        %v799 = vperm.slane %v677, %v798
        %vm800 = vcmask 326912
        %v801 = vsel %vm800, %v799, %v797
        %v802 = vperm.slane %v680, %v784
        %v803 = vperm.slane %v683, %v786
        %v804 = vsel %vm788, %v803, %v802
        %v805 = vperm.slane %v686, %v790
        %v806 = vsel %vm792, %v805, %v804
        %v807 = vperm.slane %v689, %v794
        %v808 = vsel %vm796, %v807, %v806
        %v809 = vperm.slane %v692, %v798
        %v810 = vsel %vm800, %v809, %v808
        %v811 = vperm.slane %v695, %v784
        %v812 = vperm.slane %v698, %v786
        %v813 = vsel %vm788, %v812, %v811
        %v814 = vperm.slane %v701, %v790
        %v815 = vsel %vm792, %v814, %v813
        %v816 = vperm.slane %v704, %v794
        %v817 = vsel %vm796, %v816, %v815
        %v818 = vperm.slane %v707, %v798
        %v819 = vsel %vm800, %v818, %v817
        %v820 = vperm.slane %v710, %v784
        %v821 = vperm.slane %v713, %v786
        %v822 = vsel %vm788, %v821, %v820
        %v823 = vperm.slane %v716, %v790
        %v824 = vsel %vm792, %v823, %v822
        %v825 = vperm.slane %v719, %v794
        %v826 = vsel %vm796, %v825, %v824
        %v827 = vperm.slane %v722, %v798
        %v828 = vsel %vm800, %v827, %v826
        %v829 = vperm.slane %v725, %v784
        %v830 = vperm.slane %v728, %v786
        %v831 = vsel %vm788, %v830, %v829
        %v832 = vperm.slane %v731, %v790
        %v833 = vsel %vm792, %v832, %v831
        %v834 = vperm.slane %v734, %v794
        %v835 = vsel %vm796, %v834, %v833
        %v836 = vperm.slane %v737, %v798
        %v837 = vsel %vm800, %v836, %v835
        %v838 = vperm.slane %v740, %v784
        %v839 = vperm.slane %v743, %v786
        %v840 = vsel %vm788, %v839, %v838
        %v841 = vperm.slane %v746, %v790
        %v842 = vsel %vm792, %v841, %v840
        %v843 = vperm.slane %v749, %v794
        %v844 = vsel %vm796, %v843, %v842
        %v845 = vperm.slane %v752, %v798
        %v846 = vsel %vm800, %v845, %v844
        %v847 = vperm.slane %v755, %v784
        %v848 = vperm.slane %v758, %v786
        %v849 = vsel %vm788, %v848, %v847
        %v850 = vperm.slane %v761, %v790
        %v851 = vsel %vm792, %v850, %v849
        %v852 = vperm.slane %v764, %v794
        %v853 = vsel %vm796, %v852, %v851
        %v854 = vperm.slane %v767, %v798
        %v855 = vsel %vm800, %v854, %v853
        %v856 = vperm.slane %v770, %v784
        %v857 = vperm.slane %v773, %v786
        %v858 = vsel %vm788, %v857, %v856
        %v859 = vperm.slane %v776, %v790
        %v860 = vsel %vm792, %v859, %v858
        %v861 = vperm.slane %v779, %v794
        %v862 = vsel %vm796, %v861, %v860
        %v863 = vperm.slane %v782, %v798
        %v864 = vsel %vm800, %v863, %v862
        %vm865 = vcmask 1041409
        %v866 = vsel %vm865, %v810, %v801
        %vm867 = vcmask 1042434
        %v868 = vsel %vm867, %v819, %v866
        %vm869 = vcmask 1043459
        %v870 = vsel %vm869, %v828, %v868
        %vm871 = vcmask 1044484
        %v872 = vsel %vm871, %v837, %v870
        %vm873 = vcmask 1045509
        %v874 = vsel %vm873, %v846, %v872
        %vm875 = vcmask 1046534
        %v876 = vsel %vm875, %v855, %v874
        %vm877 = vcmask 1047559
        %v878 = vsel %vm877, %v864, %v876
        %vm880 = vcmask 293888
        %v881 = vsel %vm880, %v878, -inf
        %882 = vmax.xlane.f32.xlu0 %v881
        %v883 = vpop.xlane.xlu0 %882
        %v885 = vperm.slane %v883, 0
        %v886 = vperm.slane %v883, 1
        %v887 = vperm.slane %v883, 2
        %v888 = vperm.slane %v883, 3
        %v889 = vperm.slane %v883, 4
        %v890 = vperm.slane %v883, 5
        %v891 = vperm.slane %v883, 6
        %v892 = vperm.slane %v883, 7
        %v901 = vsub.f32 %v583, %v885
        %v902 = vsub.f32 %v584, %v885
        %v903 = vsub.f32 %v585, %v885
        %v904 = vsub.f32 %v586, %v885
        %v905 = vsub.f32 %v587, %v885
        %v906 = vsub.f32 %v588, %v886
        %v907 = vsub.f32 %v589, %v886
        %v908 = vsub.f32 %v590, %v886
        %v909 = vsub.f32 %v591, %v886
        %v910 = vsub.f32 %v592, %v886
        %v911 = vsub.f32 %v593, %v887
        %v912 = vsub.f32 %v594, %v887
        %v913 = vsub.f32 %v595, %v887
        %v914 = vsub.f32 %v596, %v887
        %v915 = vsub.f32 %v597, %v887
        %v916 = vsub.f32 %v598, %v888
        %v917 = vsub.f32 %v599, %v888
        %v918 = vsub.f32 %v600, %v888
        %v919 = vsub.f32 %v601, %v888
        %v920 = vsub.f32 %v602, %v888
        %v921 = vsub.f32 %v603, %v889
        %v922 = vsub.f32 %v604, %v889
        %v923 = vsub.f32 %v605, %v889
        %v924 = vsub.f32 %v606, %v889
        %v925 = vsub.f32 %v607, %v889
        %v926 = vsub.f32 %v608, %v890
        %v927 = vsub.f32 %v609, %v890
        %v928 = vsub.f32 %v610, %v890
        %v929 = vsub.f32 %v611, %v890
        %v930 = vsub.f32 %v612, %v890
        %v931 = vsub.f32 %v613, %v891
        %v932 = vsub.f32 %v614, %v891
        %v933 = vsub.f32 %v615, %v891
        %v934 = vsub.f32 %v616, %v891
        %v935 = vsub.f32 %v617, %v891
        %v936 = vsub.f32 %v618, %v892
        %v937 = vsub.f32 %v619, %v892
        %v938 = vsub.f32 %v620, %v892
        %v939 = vsub.f32 %v621, %v892
        %v940 = vsub.f32 %v622, %v892
        %v941 = vmul.f32 %v901, 1.442695
        %v942 = vpow.pop %v941
        %v943 = vmul.f32 %v902, 1.442695
        %v944 = vpow.pop %v943
        %v945 = vmul.f32 %v903, 1.442695
        %v946 = vpow.pop %v945
        %v947 = vmul.f32 %v904, 1.442695
        %v948 = vpow.pop %v947
        %v949 = vmul.f32 %v905, 1.442695
        %v950 = vpow.pop %v949
        %v951 = vmul.f32 %v906, 1.442695
        %v952 = vpow.pop %v951
        %v953 = vmul.f32 %v907, 1.442695
        %v954 = vpow.pop %v953
        %v955 = vmul.f32 %v908, 1.442695
        %v956 = vpow.pop %v955
        %v957 = vmul.f32 %v909, 1.442695
        %v958 = vpow.pop %v957
        %v959 = vmul.f32 %v910, 1.442695
        %v960 = vpow.pop %v959
        %v961 = vmul.f32 %v911, 1.442695
        %v962 = vpow.pop %v961
        %v963 = vmul.f32 %v912, 1.442695
        %v964 = vpow.pop %v963
        %v965 = vmul.f32 %v913, 1.442695
        %v966 = vpow.pop %v965
        %v967 = vmul.f32 %v914, 1.442695
        %v968 = vpow.pop %v967
        %v969 = vmul.f32 %v915, 1.442695
        %v970 = vpow.pop %v969
        %v971 = vmul.f32 %v916, 1.442695
        %v972 = vpow.pop %v971
        %v973 = vmul.f32 %v917, 1.442695
        %v974 = vpow.pop %v973
        %v975 = vmul.f32 %v918, 1.442695
        %v976 = vpow.pop %v975
        %v977 = vmul.f32 %v919, 1.442695
        %v978 = vpow.pop %v977
        %v979 = vmul.f32 %v920, 1.442695
        %v980 = vpow.pop %v979
        %v981 = vmul.f32 %v921, 1.442695
        %v982 = vpow.pop %v981
        %v983 = vmul.f32 %v922, 1.442695
        %v984 = vpow.pop %v983
        %v985 = vmul.f32 %v923, 1.442695
        %v986 = vpow.pop %v985
        %v987 = vmul.f32 %v924, 1.442695
        %v988 = vpow.pop %v987
        %v989 = vmul.f32 %v925, 1.442695
        %v990 = vpow.pop %v989
        %v991 = vmul.f32 %v926, 1.442695
        %v992 = vpow.pop %v991
        %v993 = vmul.f32 %v927, 1.442695
        %v994 = vpow.pop %v993
        %v995 = vmul.f32 %v928, 1.442695
        %v996 = vpow.pop %v995
        %v997 = vmul.f32 %v929, 1.442695
        %v998 = vpow.pop %v997
        %v999 = vmul.f32 %v930, 1.442695
        %v1000 = vpow.pop %v999
        %v1001 = vmul.f32 %v931, 1.442695
        %v1002 = vpow.pop %v1001
        %v1003 = vmul.f32 %v932, 1.442695
        %v1004 = vpow.pop %v1003
        %v1005 = vmul.f32 %v933, 1.442695
        %v1006 = vpow.pop %v1005
        %v1007 = vmul.f32 %v934, 1.442695
        %v1008 = vpow.pop %v1007
        %v1009 = vmul.f32 %v935, 1.442695
        %v1010 = vpow.pop %v1009
        %v1011 = vmul.f32 %v936, 1.442695
        %v1012 = vpow.pop %v1011
        %v1013 = vmul.f32 %v937, 1.442695
        %v1014 = vpow.pop %v1013
        %v1015 = vmul.f32 %v938, 1.442695
        %v1016 = vpow.pop %v1015
        %v1017 = vmul.f32 %v939, 1.442695
        %v1018 = vpow.pop %v1017
        %v1019 = vmul.f32 %v940, 1.442695
        %v1020 = vpow.pop %v1019
        %1061 = vset.pattern.permute.xlu0 0
        %1062 = vperm.xlu0 %1061, %v942
        %v1063 = vpop.permute.xlu0 %1062
        %1064 = vset.pattern.permute.xlu0 0
        %1065 = vperm.xlu0 %1064, %v944
        %v1066 = vpop.permute.xlu0 %1065
        %1067 = vset.pattern.permute.xlu0 0
        %1068 = vperm.xlu0 %1067, %v946
        %v1069 = vpop.permute.xlu0 %1068
        %1070 = vset.pattern.permute.xlu0 0
        %1071 = vperm.xlu0 %1070, %v948
        %v1072 = vpop.permute.xlu0 %1071
        %1073 = vset.pattern.permute.xlu0 0
        %1074 = vperm.xlu0 %1073, %v950
        %v1075 = vpop.permute.xlu0 %1074
        %1076 = vset.pattern.permute.xlu0 0
        %1077 = vperm.xlu0 %1076, %v952
        %v1078 = vpop.permute.xlu0 %1077
        %1079 = vset.pattern.permute.xlu0 0
        %1080 = vperm.xlu0 %1079, %v954
        %v1081 = vpop.permute.xlu0 %1080
        %1082 = vset.pattern.permute.xlu0 0
        %1083 = vperm.xlu0 %1082, %v956
        %v1084 = vpop.permute.xlu0 %1083
        %1085 = vset.pattern.permute.xlu0 0
        %1086 = vperm.xlu0 %1085, %v958
        %v1087 = vpop.permute.xlu0 %1086
        %1088 = vset.pattern.permute.xlu0 0
        %1089 = vperm.xlu0 %1088, %v960
        %v1090 = vpop.permute.xlu0 %1089
        %1091 = vset.pattern.permute.xlu0 0
        %1092 = vperm.xlu0 %1091, %v962
        %v1093 = vpop.permute.xlu0 %1092
        %1094 = vset.pattern.permute.xlu0 0
        %1095 = vperm.xlu0 %1094, %v964
        %v1096 = vpop.permute.xlu0 %1095
        %1097 = vset.pattern.permute.xlu0 0
        %1098 = vperm.xlu0 %1097, %v966
        %v1099 = vpop.permute.xlu0 %1098
        %1100 = vset.pattern.permute.xlu0 0
        %1101 = vperm.xlu0 %1100, %v968
        %v1102 = vpop.permute.xlu0 %1101
        %1103 = vset.pattern.permute.xlu0 0
        %1104 = vperm.xlu0 %1103, %v970
        %v1105 = vpop.permute.xlu0 %1104
        %1106 = vset.pattern.permute.xlu0 0
        %1107 = vperm.xlu0 %1106, %v972
        %v1108 = vpop.permute.xlu0 %1107
        %1109 = vset.pattern.permute.xlu0 0
        %1110 = vperm.xlu0 %1109, %v974
        %v1111 = vpop.permute.xlu0 %1110
        %1112 = vset.pattern.permute.xlu0 0
        %1113 = vperm.xlu0 %1112, %v976
        %v1114 = vpop.permute.xlu0 %1113
        %1115 = vset.pattern.permute.xlu0 0
        %1116 = vperm.xlu0 %1115, %v978
        %v1117 = vpop.permute.xlu0 %1116
        %1118 = vset.pattern.permute.xlu0 0
        %1119 = vperm.xlu0 %1118, %v980
        %v1120 = vpop.permute.xlu0 %1119
        %1121 = vset.pattern.permute.xlu0 0
        %1122 = vperm.xlu0 %1121, %v982
        %v1123 = vpop.permute.xlu0 %1122
        %1124 = vset.pattern.permute.xlu0 0
        %1125 = vperm.xlu0 %1124, %v984
        %v1126 = vpop.permute.xlu0 %1125
        %1127 = vset.pattern.permute.xlu0 0
        %1128 = vperm.xlu0 %1127, %v986
        %v1129 = vpop.permute.xlu0 %1128
        %1130 = vset.pattern.permute.xlu0 0
        %1131 = vperm.xlu0 %1130, %v988
        %v1132 = vpop.permute.xlu0 %1131
        %1133 = vset.pattern.permute.xlu0 0
        %1134 = vperm.xlu0 %1133, %v990
        %v1135 = vpop.permute.xlu0 %1134
        %1136 = vset.pattern.permute.xlu0 0
        %1137 = vperm.xlu0 %1136, %v992
        %v1138 = vpop.permute.xlu0 %1137
        %1139 = vset.pattern.permute.xlu0 0
        %1140 = vperm.xlu0 %1139, %v994
        %v1141 = vpop.permute.xlu0 %1140
        %1142 = vset.pattern.permute.xlu0 0
        %1143 = vperm.xlu0 %1142, %v996
        %v1144 = vpop.permute.xlu0 %1143
        %1145 = vset.pattern.permute.xlu0 0
        %1146 = vperm.xlu0 %1145, %v998
        %v1147 = vpop.permute.xlu0 %1146
        %1148 = vset.pattern.permute.xlu0 0
        %1149 = vperm.xlu0 %1148, %v1000
        %v1150 = vpop.permute.xlu0 %1149
        %1151 = vset.pattern.permute.xlu0 0
        %1152 = vperm.xlu0 %1151, %v1002
        %v1153 = vpop.permute.xlu0 %1152
        %1154 = vset.pattern.permute.xlu0 0
        %1155 = vperm.xlu0 %1154, %v1004
        %v1156 = vpop.permute.xlu0 %1155
        %1157 = vset.pattern.permute.xlu0 0
        %1158 = vperm.xlu0 %1157, %v1006
        %v1159 = vpop.permute.xlu0 %1158
        %1160 = vset.pattern.permute.xlu0 0
        %1161 = vperm.xlu0 %1160, %v1008
        %v1162 = vpop.permute.xlu0 %1161
        %1163 = vset.pattern.permute.xlu0 0
        %1164 = vperm.xlu0 %1163, %v1010
        %v1165 = vpop.permute.xlu0 %1164
        %1166 = vset.pattern.permute.xlu0 0
        %1167 = vperm.xlu0 %1166, %v1012
        %v1168 = vpop.permute.xlu0 %1167
        %1169 = vset.pattern.permute.xlu0 0
        %1170 = vperm.xlu0 %1169, %v1014
        %v1171 = vpop.permute.xlu0 %1170
        %1172 = vset.pattern.permute.xlu0 0
        %1173 = vperm.xlu0 %1172, %v1016
        %v1174 = vpop.permute.xlu0 %1173
        %1175 = vset.pattern.permute.xlu0 0
        %1176 = vperm.xlu0 %1175, %v1018
        %v1177 = vpop.permute.xlu0 %1176
        %1178 = vset.pattern.permute.xlu0 0
        %1179 = vperm.xlu0 %1178, %v1020
        %v1180 = vpop.permute.xlu0 %1179
        %v1181 = vperm.slane %v1063, %v784
        %v1182 = vperm.slane %v1066, %v786
        %v1183 = vsel %vm788, %v1182, %v1181
        %v1184 = vperm.slane %v1069, %v790
        %v1185 = vsel %vm792, %v1184, %v1183
        %v1186 = vperm.slane %v1072, %v794
        %v1187 = vsel %vm796, %v1186, %v1185
        %v1188 = vperm.slane %v1075, %v798
        %v1189 = vsel %vm800, %v1188, %v1187
        %v1190 = vperm.slane %v1078, %v784
        %v1191 = vperm.slane %v1081, %v786
        %v1192 = vsel %vm788, %v1191, %v1190
        %v1193 = vperm.slane %v1084, %v790
        %v1194 = vsel %vm792, %v1193, %v1192
        %v1195 = vperm.slane %v1087, %v794
        %v1196 = vsel %vm796, %v1195, %v1194
        %v1197 = vperm.slane %v1090, %v798
        %v1198 = vsel %vm800, %v1197, %v1196
        %v1199 = vperm.slane %v1093, %v784
        %v1200 = vperm.slane %v1096, %v786
        %v1201 = vsel %vm788, %v1200, %v1199
        %v1202 = vperm.slane %v1099, %v790
        %v1203 = vsel %vm792, %v1202, %v1201
        %v1204 = vperm.slane %v1102, %v794
        %v1205 = vsel %vm796, %v1204, %v1203
        %v1206 = vperm.slane %v1105, %v798
        %v1207 = vsel %vm800, %v1206, %v1205
        %v1208 = vperm.slane %v1108, %v784
        %v1209 = vperm.slane %v1111, %v786
        %v1210 = vsel %vm788, %v1209, %v1208
        %v1211 = vperm.slane %v1114, %v790
        %v1212 = vsel %vm792, %v1211, %v1210
        %v1213 = vperm.slane %v1117, %v794
        %v1214 = vsel %vm796, %v1213, %v1212
        %v1215 = vperm.slane %v1120, %v798
        %v1216 = vsel %vm800, %v1215, %v1214
        %v1217 = vperm.slane %v1123, %v784
        %v1218 = vperm.slane %v1126, %v786
        %v1219 = vsel %vm788, %v1218, %v1217
        %v1220 = vperm.slane %v1129, %v790
        %v1221 = vsel %vm792, %v1220, %v1219
        %v1222 = vperm.slane %v1132, %v794
        %v1223 = vsel %vm796, %v1222, %v1221
        %v1224 = vperm.slane %v1135, %v798
        %v1225 = vsel %vm800, %v1224, %v1223
        %v1226 = vperm.slane %v1138, %v784
        %v1227 = vperm.slane %v1141, %v786
        %v1228 = vsel %vm788, %v1227, %v1226
        %v1229 = vperm.slane %v1144, %v790
        %v1230 = vsel %vm792, %v1229, %v1228
        %v1231 = vperm.slane %v1147, %v794
        %v1232 = vsel %vm796, %v1231, %v1230
        %v1233 = vperm.slane %v1150, %v798
        %v1234 = vsel %vm800, %v1233, %v1232
        %v1235 = vperm.slane %v1153, %v784
        %v1236 = vperm.slane %v1156, %v786
        %v1237 = vsel %vm788, %v1236, %v1235
        %v1238 = vperm.slane %v1159, %v790
        %v1239 = vsel %vm792, %v1238, %v1237
        %v1240 = vperm.slane %v1162, %v794
        %v1241 = vsel %vm796, %v1240, %v1239
        %v1242 = vperm.slane %v1165, %v798
        %v1243 = vsel %vm800, %v1242, %v1241
        %v1244 = vperm.slane %v1168, %v784
        %v1245 = vperm.slane %v1171, %v786
        %v1246 = vsel %vm788, %v1245, %v1244
        %v1247 = vperm.slane %v1174, %v790
        %v1248 = vsel %vm792, %v1247, %v1246
        %v1249 = vperm.slane %v1177, %v794
        %v1250 = vsel %vm796, %v1249, %v1248
        %v1251 = vperm.slane %v1180, %v798
        %v1252 = vsel %vm800, %v1251, %v1250
        %v1253 = vsel %vm865, %v1198, %v1189
        %v1254 = vsel %vm867, %v1207, %v1253
        %v1255 = vsel %vm869, %v1216, %v1254
        %v1256 = vsel %vm871, %v1225, %v1255
        %v1257 = vsel %vm873, %v1234, %v1256
        %v1258 = vsel %vm875, %v1243, %v1257
        %v1259 = vsel %vm877, %v1252, %v1258
        %v1261 = vsel %vm880, %v1259, 0.0
        %1262 = vadd.xlane.f32.xlu0 %v1261
        %v1263 = vpop.xlane.xlu0 %1262
        %v1264 = vrcp.pop %v1263
        %v1266 = vperm.slane %v1264, 0
        %v1267 = vperm.slane %v1264, 1
        %v1268 = vperm.slane %v1264, 2
        %v1269 = vperm.slane %v1264, 3
        %v1270 = vperm.slane %v1264, 4
        %v1271 = vperm.slane %v1264, 5
        %v1272 = vperm.slane %v1264, 6
        %v1273 = vperm.slane %v1264, 7
        %v1282 = vmul.f32 %v942, %v1266
        %v1283 = vmul.f32 %v944, %v1266
        %v1284 = vmul.f32 %v946, %v1266
        %v1285 = vmul.f32 %v948, %v1266
        %v1286 = vmul.f32 %v950, %v1266
        %v1287 = vmul.f32 %v952, %v1267
        %v1288 = vmul.f32 %v954, %v1267
        %v1289 = vmul.f32 %v956, %v1267
        %v1290 = vmul.f32 %v958, %v1267
        %v1291 = vmul.f32 %v960, %v1267
        %v1292 = vmul.f32 %v962, %v1268
        %v1293 = vmul.f32 %v964, %v1268
        %v1294 = vmul.f32 %v966, %v1268
        %v1295 = vmul.f32 %v968, %v1268
        %v1296 = vmul.f32 %v970, %v1268
        %v1297 = vmul.f32 %v972, %v1269
        %v1298 = vmul.f32 %v974, %v1269
        %v1299 = vmul.f32 %v976, %v1269
        %v1300 = vmul.f32 %v978, %v1269
        %v1301 = vmul.f32 %v980, %v1269
        %v1302 = vmul.f32 %v982, %v1270
        %v1303 = vmul.f32 %v984, %v1270
        %v1304 = vmul.f32 %v986, %v1270
        %v1305 = vmul.f32 %v988, %v1270
        %v1306 = vmul.f32 %v990, %v1270
        %v1307 = vmul.f32 %v992, %v1271
        %v1308 = vmul.f32 %v994, %v1271
        %v1309 = vmul.f32 %v996, %v1271
        %v1310 = vmul.f32 %v998, %v1271
        %v1311 = vmul.f32 %v1000, %v1271
        %v1312 = vmul.f32 %v1002, %v1272
        %v1313 = vmul.f32 %v1004, %v1272
        %v1314 = vmul.f32 %v1006, %v1272
        %v1315 = vmul.f32 %v1008, %v1272
        %v1316 = vmul.f32 %v1010, %v1272
        %v1317 = vmul.f32 %v1012, %v1273
        %v1318 = vmul.f32 %v1014, %v1273
        %v1319 = vmul.f32 %v1016, %v1273
        %v1320 = vmul.f32 %v1018, %v1273
        %v1321 = vmul.f32 %v1020, %v1273
        %1323 = vset.pattern.permute.xlu0 0
        %1324 = vperm.xlu0 %1323, %v1282
        %v1325 = vpop.permute.xlu0 %1324
        %1328 = vset.pattern.permute.xlu0 0
        %1329 = vperm.xlu0 %1328, %v1283
        %v1330 = vpop.permute.xlu0 %1329
        %1333 = vset.pattern.permute.xlu0 0
        %1334 = vperm.xlu0 %1333, %v1284
        %v1335 = vpop.permute.xlu0 %1334
        %1338 = vset.pattern.permute.xlu0 0
        %1339 = vperm.xlu0 %1338, %v1285
        %v1340 = vpop.permute.xlu0 %1339
        %1343 = vset.pattern.permute.xlu0 0
        %1344 = vperm.xlu0 %1343, %v1286
        %v1345 = vpop.permute.xlu0 %1344
        %1348 = vset.pattern.permute.xlu0 0
        %1349 = vperm.xlu0 %1348, %v1287
        %v1350 = vpop.permute.xlu0 %1349
        %1353 = vset.pattern.permute.xlu0 0
        %1354 = vperm.xlu0 %1353, %v1288
        %v1355 = vpop.permute.xlu0 %1354
        %1358 = vset.pattern.permute.xlu0 0
        %1359 = vperm.xlu0 %1358, %v1289
        %v1360 = vpop.permute.xlu0 %1359
        %1363 = vset.pattern.permute.xlu0 0
        %1364 = vperm.xlu0 %1363, %v1290
        %v1365 = vpop.permute.xlu0 %1364
        %1368 = vset.pattern.permute.xlu0 0
        %1369 = vperm.xlu0 %1368, %v1291
        %v1370 = vpop.permute.xlu0 %1369
        %1373 = vset.pattern.permute.xlu0 0
        %1374 = vperm.xlu0 %1373, %v1292
        %v1375 = vpop.permute.xlu0 %1374
        %1378 = vset.pattern.permute.xlu0 0
        %1379 = vperm.xlu0 %1378, %v1293
        %v1380 = vpop.permute.xlu0 %1379
        %1383 = vset.pattern.permute.xlu0 0
        %1384 = vperm.xlu0 %1383, %v1294
        %v1385 = vpop.permute.xlu0 %1384
        %1388 = vset.pattern.permute.xlu0 0
        %1389 = vperm.xlu0 %1388, %v1295
        %v1390 = vpop.permute.xlu0 %1389
        %1393 = vset.pattern.permute.xlu0 0
        %1394 = vperm.xlu0 %1393, %v1296
        %v1395 = vpop.permute.xlu0 %1394
        %1398 = vset.pattern.permute.xlu0 0
        %1399 = vperm.xlu0 %1398, %v1297
        %v1400 = vpop.permute.xlu0 %1399
        %1403 = vset.pattern.permute.xlu0 0
        %1404 = vperm.xlu0 %1403, %v1298
        %v1405 = vpop.permute.xlu0 %1404
        %1408 = vset.pattern.permute.xlu0 0
        %1409 = vperm.xlu0 %1408, %v1299
        %v1410 = vpop.permute.xlu0 %1409
        %1413 = vset.pattern.permute.xlu0 0
        %1414 = vperm.xlu0 %1413, %v1300
        %v1415 = vpop.permute.xlu0 %1414
        %1418 = vset.pattern.permute.xlu0 0
        %1419 = vperm.xlu0 %1418, %v1301
        %v1420 = vpop.permute.xlu0 %1419
        %1423 = vset.pattern.permute.xlu0 0
        %1424 = vperm.xlu0 %1423, %v1302
        %v1425 = vpop.permute.xlu0 %1424
        %1428 = vset.pattern.permute.xlu0 0
        %1429 = vperm.xlu0 %1428, %v1303
        %v1430 = vpop.permute.xlu0 %1429
        %1433 = vset.pattern.permute.xlu0 0
        %1434 = vperm.xlu0 %1433, %v1304
        %v1435 = vpop.permute.xlu0 %1434
        %1438 = vset.pattern.permute.xlu0 0
        %1439 = vperm.xlu0 %1438, %v1305
        %v1440 = vpop.permute.xlu0 %1439
        %1443 = vset.pattern.permute.xlu0 0
        %1444 = vperm.xlu0 %1443, %v1306
        %v1445 = vpop.permute.xlu0 %1444
        %1448 = vset.pattern.permute.xlu0 0
        %1449 = vperm.xlu0 %1448, %v1307
        %v1450 = vpop.permute.xlu0 %1449
        %1453 = vset.pattern.permute.xlu0 0
        %1454 = vperm.xlu0 %1453, %v1308
        %v1455 = vpop.permute.xlu0 %1454
        %1458 = vset.pattern.permute.xlu0 0
        %1459 = vperm.xlu0 %1458, %v1309
        %v1460 = vpop.permute.xlu0 %1459
        %1463 = vset.pattern.permute.xlu0 0
        %1464 = vperm.xlu0 %1463, %v1310
        %v1465 = vpop.permute.xlu0 %1464
        %1468 = vset.pattern.permute.xlu0 0
        %1469 = vperm.xlu0 %1468, %v1311
        %v1470 = vpop.permute.xlu0 %1469
        %1473 = vset.pattern.permute.xlu0 0
        %1474 = vperm.xlu0 %1473, %v1312
        %v1475 = vpop.permute.xlu0 %1474
        %1478 = vset.pattern.permute.xlu0 0
        %1479 = vperm.xlu0 %1478, %v1313
        %v1480 = vpop.permute.xlu0 %1479
        %1483 = vset.pattern.permute.xlu0 0
        %1484 = vperm.xlu0 %1483, %v1314
        %v1485 = vpop.permute.xlu0 %1484
        %1488 = vset.pattern.permute.xlu0 0
        %1489 = vperm.xlu0 %1488, %v1315
        %v1490 = vpop.permute.xlu0 %1489
        %1493 = vset.pattern.permute.xlu0 0
        %1494 = vperm.xlu0 %1493, %v1316
        %v1495 = vpop.permute.xlu0 %1494
        %1498 = vset.pattern.permute.xlu0 0
        %1499 = vperm.xlu0 %1498, %v1317
        %v1500 = vpop.permute.xlu0 %1499
        %1503 = vset.pattern.permute.xlu0 0
        %1504 = vperm.xlu0 %1503, %v1318
        %v1505 = vpop.permute.xlu0 %1504
        %1508 = vset.pattern.permute.xlu0 0
        %1509 = vperm.xlu0 %1508, %v1319
        %v1510 = vpop.permute.xlu0 %1509
        %1513 = vset.pattern.permute.xlu0 0
        %1514 = vperm.xlu0 %1513, %v1320
        %v1515 = vpop.permute.xlu0 %1514
        %1518 = vset.pattern.permute.xlu0 0
        %1519 = vperm.xlu0 %1518, %v1321
        %v1520 = vpop.permute.xlu0 %1519
        %v1522 = vmul.f32 %v301, %v1325
        %v1523 = vmul.f32 %v302, %v1330
        %v1524 = vmul.f32 %v303, %v1335
        %v1525 = vmul.f32 %v304, %v1340
        %v1526 = vmul.f32 %v305, %v1345
        %v1527 = vmul.f32 %v306, %v1350
        %v1528 = vmul.f32 %v307, %v1355
        %v1529 = vmul.f32 %v308, %v1360
        %v1530 = vmul.f32 %v309, %v1365
        %v1531 = vmul.f32 %v310, %v1370
        %v1532 = vmul.f32 %v311, %v1375
        %v1533 = vmul.f32 %v312, %v1380
        %v1534 = vmul.f32 %v313, %v1385
        %v1535 = vmul.f32 %v314, %v1390
        %v1536 = vmul.f32 %v315, %v1395
        %v1537 = vmul.f32 %v316, %v1400
        %v1538 = vmul.f32 %v317, %v1405
        %v1539 = vmul.f32 %v318, %v1410
        %v1540 = vmul.f32 %v319, %v1415
        %v1541 = vmul.f32 %v320, %v1420
        %v1542 = vmul.f32 %v321, %v1425
        %v1543 = vmul.f32 %v322, %v1430
        %v1544 = vmul.f32 %v323, %v1435
        %v1545 = vmul.f32 %v324, %v1440
        %v1546 = vmul.f32 %v325, %v1445
        %v1547 = vmul.f32 %v326, %v1450
        %v1548 = vmul.f32 %v327, %v1455
        %v1549 = vmul.f32 %v328, %v1460
        %v1550 = vmul.f32 %v329, %v1465
        %v1551 = vmul.f32 %v330, %v1470
        %v1552 = vmul.f32 %v331, %v1475
        %v1553 = vmul.f32 %v332, %v1480
        %v1554 = vmul.f32 %v333, %v1485
        %v1555 = vmul.f32 %v334, %v1490
        %v1556 = vmul.f32 %v335, %v1495
        %v1557 = vmul.f32 %v336, %v1500
        %v1558 = vmul.f32 %v337, %v1505
        %v1559 = vmul.f32 %v338, %v1510
        %v1560 = vmul.f32 %v339, %v1515
        %v1561 = vmul.f32 %v340, %v1520
        %v1562 = vadd.f32 %v1522, %v1523
        %v1563 = vadd.f32 %v1562, %v1524
        %v1564 = vadd.f32 %v1563, %v1525
        %v1565 = vsel %vm396, %v1526, 0.0
        %v1566 = vadd.f32 %v1564, %v1565
        %v1567 = vrot.slane %v1566, 4
        %v1568 = vadd.f32 %v1566, %v1567
        %v1569 = vrot.slane %v1568, 2
        %v1570 = vadd.f32 %v1568, %v1569
        %v1571 = vrot.slane %v1570, 1
        %v1572 = vadd.f32 %v1570, %v1571
        %v1573 = vadd.f32 %v1527, %v1528
        %v1574 = vadd.f32 %v1573, %v1529
        %v1575 = vadd.f32 %v1574, %v1530
        %v1576 = vsel %vm396, %v1531, 0.0
        %v1577 = vadd.f32 %v1575, %v1576
        %v1578 = vrot.slane %v1577, 4
        %v1579 = vadd.f32 %v1577, %v1578
        %v1580 = vrot.slane %v1579, 2
        %v1581 = vadd.f32 %v1579, %v1580
        %v1582 = vrot.slane %v1581, 1
        %v1583 = vadd.f32 %v1581, %v1582
        %v1584 = vadd.f32 %v1532, %v1533
        %v1585 = vadd.f32 %v1584, %v1534
        %v1586 = vadd.f32 %v1585, %v1535
        %v1587 = vsel %vm396, %v1536, 0.0
        %v1588 = vadd.f32 %v1586, %v1587
        %v1589 = vrot.slane %v1588, 4
        %v1590 = vadd.f32 %v1588, %v1589
        %v1591 = vrot.slane %v1590, 2
        %v1592 = vadd.f32 %v1590, %v1591
        %v1593 = vrot.slane %v1592, 1
        %v1594 = vadd.f32 %v1592, %v1593
        %v1595 = vadd.f32 %v1537, %v1538
        %v1596 = vadd.f32 %v1595, %v1539
        %v1597 = vadd.f32 %v1596, %v1540
        %v1598 = vsel %vm396, %v1541, 0.0
        %v1599 = vadd.f32 %v1597, %v1598
        %v1600 = vrot.slane %v1599, 4
        %v1601 = vadd.f32 %v1599, %v1600
        %v1602 = vrot.slane %v1601, 2
        %v1603 = vadd.f32 %v1601, %v1602
        %v1604 = vrot.slane %v1603, 1
        %v1605 = vadd.f32 %v1603, %v1604
        %v1606 = vadd.f32 %v1542, %v1543
        %v1607 = vadd.f32 %v1606, %v1544
        %v1608 = vadd.f32 %v1607, %v1545
        %v1609 = vsel %vm396, %v1546, 0.0
        %v1610 = vadd.f32 %v1608, %v1609
        %v1611 = vrot.slane %v1610, 4
        %v1612 = vadd.f32 %v1610, %v1611
        %v1613 = vrot.slane %v1612, 2
        %v1614 = vadd.f32 %v1612, %v1613
        %v1615 = vrot.slane %v1614, 1
        %v1616 = vadd.f32 %v1614, %v1615
        %v1617 = vadd.f32 %v1547, %v1548
        %v1618 = vadd.f32 %v1617, %v1549
        %v1619 = vadd.f32 %v1618, %v1550
        %v1620 = vsel %vm396, %v1551, 0.0
        %v1621 = vadd.f32 %v1619, %v1620
        %v1622 = vrot.slane %v1621, 4
        %v1623 = vadd.f32 %v1621, %v1622
        %v1624 = vrot.slane %v1623, 2
        %v1625 = vadd.f32 %v1623, %v1624
        %v1626 = vrot.slane %v1625, 1
        %v1627 = vadd.f32 %v1625, %v1626
        %v1628 = vadd.f32 %v1552, %v1553
        %v1629 = vadd.f32 %v1628, %v1554
        %v1630 = vadd.f32 %v1629, %v1555
        %v1631 = vsel %vm396, %v1556, 0.0
        %v1632 = vadd.f32 %v1630, %v1631
        %v1633 = vrot.slane %v1632, 4
        %v1634 = vadd.f32 %v1632, %v1633
        %v1635 = vrot.slane %v1634, 2
        %v1636 = vadd.f32 %v1634, %v1635
        %v1637 = vrot.slane %v1636, 1
        %v1638 = vadd.f32 %v1636, %v1637
        %v1639 = vadd.f32 %v1557, %v1558
        %v1640 = vadd.f32 %v1639, %v1559
        %v1641 = vadd.f32 %v1640, %v1560
        %v1642 = vsel %vm396, %v1561, 0.0
        %v1643 = vadd.f32 %v1641, %v1642
        %v1644 = vrot.slane %v1643, 4
        %v1645 = vadd.f32 %v1643, %v1644
        %v1646 = vrot.slane %v1645, 2
        %v1647 = vadd.f32 %v1645, %v1646
        %v1648 = vrot.slane %v1647, 1
        %v1649 = vadd.f32 %v1647, %v1648
        %v1658 = vsel %vm865, %v1583, %v1572
        %v1659 = vsel %vm867, %v1594, %v1658
        %v1660 = vsel %vm869, %v1605, %v1659
        %v1661 = vsel %vm871, %v1616, %v1660
        %v1662 = vsel %vm873, %v1627, %v1661
        %v1663 = vsel %vm875, %v1638, %v1662
        %v1664 = vsel %vm877, %v1649, %v1663
        %1666 = vst [vmem:[%s294] sm:$0xff] %v1664
        %s1667 = sand.u32 %s149, 1
        %s1668 = scalar_lea.sflag [#allocation5], %s1667
        %s1669 = sand.u32 %s149, 1
        %s1670 = smul.addr %s1669, 8
        %s1671 = scalar_lea.vmem [#allocation8], %s1670
        // Predicated region
        $region49: #{tpu_custom_call.1} parent=39 // pred_check
          %p1672 = pneg %p159
        $region50: #{tpu_custom_call.1} parent=39 // pred_check_branch
          %1674 = sbr.rel (%p1672) target = $region52
        $region51: #{tpu_custom_call.1} parent=39 // pred_region
          %1676 = vsyncadd %s1668, 0
          %s1677 = smul.addr %s26, 8
          %s1678 = scalar_lea.hbm %s5, %s1677
          %s1680 = sshll.u32 %s1671, 4
          %s1681 = int_to_ptr.vmem [resolvable:$true] %s1680
          %s1682 = sshll.u32 %s1678, 4
          %s1683 = int_to_ptr.hbm [resolvable:$true] %s1682
          %1685 = dma.vmem_to_hbm [thread:$0]  %s1681, 128, %s1683, %s1668
        $region52: #{tpu_custom_call.1} parent=39 // pred_fallthru
          _
      $region40: #{tpu_custom_call.1} parent=5 // pred_fallthru
        _
      %p1686 = scmp.le.s32.totalorder 2, %s21
      // Predicated region
      $region53: #{tpu_custom_call.1} parent=5 // pred_check
        %p1687 = pneg %p1686
      $region54: #{tpu_custom_call.1} parent=5 // pred_check_branch
        %1689 = sbr.rel (%p1687) target = $region56
      $region55: #{tpu_custom_call.1} parent=5 // pred_region
        %s1690 = ssub.s32 %s21, 2
        // Predicated region
        $region57: #{tpu_custom_call.1} parent=55 // pred_check
          %p1691 = pneg %p165
        $region58: #{tpu_custom_call.1} parent=55 // pred_check_branch
          %1693 = sbr.rel (%p1691) target = $region60
        $region59: #{tpu_custom_call.1} parent=55 // pred_region
          %s1694 = sand.u32 %s150, 1
          %s1695 = scalar_lea.sflag [#allocation5], %s1694
          %s1696 = sand.u32 %s150, 1
          %s1697 = smul.addr %s1696, 8
          %s1698 = scalar_lea.vmem [#allocation8], %s1697
          %1700 = dma.done %s1695, 128
        $region60: #{tpu_custom_call.1} parent=55 // pred_fallthru
          _
      $region56: #{tpu_custom_call.1} parent=5 // pred_fallthru
        _
    $region6: #{tpu_custom_call.1} parent=1 // loop_footer
      %s25 = sadd.s32 1, %s21
    $region7: #{tpu_custom_call.1} parent=1 // loop_footer_branch
      %20 = sbr.rel target = $region3
    $region8: #{tpu_custom_call.1} parent=1 // loop_exit
      _
    %1701 = vsyncpa [#allocation4], 1
    %s1702 = scalar_lea.sflag [#allocation4], 1
    %1703 = vsyncpa %s1702, 1
    %1704 = vsyncpa [#allocation7], 1
    %s1705 = scalar_lea.sflag [#allocation7], 1
    %1706 = vsyncpa %s1705, 1
    %1707 = vsyncpa [#allocation5], 1
    %s1708 = scalar_lea.sflag [#allocation5], 1
    %1709 = vsyncpa %s1708, 1

</llo_original>
